<compile_context>
chip_gen: v5e
topology: v5e:2x2
jax: 0.10.0
libtpu: 0.0.40
codegen_flags: <defaults>
</compile_context>

<pallas_src>
import functools
import math

import jax
import jax.numpy as jnp
from jax.experimental import pallas as pl
from jax.experimental.pallas import tpu as pltpu


# ----------------------------- in-kernel helpers -----------------------------

def _erf(x):
    # Abramowitz & Stegun 7.1.26 polynomial erf.  Note: the EUP approx reciprocal in
    # `t` relaxes the polynomial's ~1.5e-7 accuracy to roughly the approx-reciprocal
    # error (~1e-4..1e-3 rel on GELU) -- comfortably inside the test tolerances given
    # bf16 matmul operands.  Use approx=False if tighter GELU matching is ever needed.
    a1, a2, a3, a4, a5 = 0.254829592, -0.284496736, 1.421413741, -1.453152027, 1.061405429
    p = 0.3275911
    ax = jnp.abs(x)
    t = pl.reciprocal(1.0 + p * ax, approx=True)
    poly = ((((a5 * t + a4) * t + a3) * t + a2) * t + a1) * t
    y = 1.0 - poly * jnp.exp(-ax * ax)
    return jnp.where(x >= 0, y, -y)


def _gelu_exact(x):
    # PyTorch nn.GELU() default (erf-based, not tanh approximation).
    return 0.5 * x * (1.0 + _erf(x * (1.0 / math.sqrt(2.0))))


def _layernorm(x, w, b, eps=1e-5):
    # x: (M, E); w, b: (1, E).  PyTorch LayerNorm: biased variance, eps=1e-5.
    mu = jnp.mean(x, axis=-1, keepdims=True)
    var = jnp.mean((x - mu) * (x - mu), axis=-1, keepdims=True)
    return (x - mu) * jax.lax.rsqrt(var + eps) * w + b


# --------------------------------- kernel ------------------------------------

def block_kernel(heads, ffn_chunk,
                 x_ref,
                 ln1w_ref, ln1b_ref,
                 wqkv_ref, wp_ref,
                 ln2w_ref, ln2b_ref,
                 w1_ref, b1_ref, w2_ref, b2_ref,
                 o_ref):
    f32 = jnp.float32
    bf16 = jnp.bfloat16

    x3 = x_ref[...]                                   # (NB, L, E) float32
    NB, L, E = x3.shape
    d = E // heads
    M = NB * L
    scale = 1.0 / math.sqrt(d)

    x2 = x3.reshape(M, E)                             # fold batch block into matmul M dim

    # ---- pre-attention LayerNorm + fused QKV projection (MHA has bias=False) ----
    ln1 = _layernorm(x2, ln1w_ref[...], ln1b_ref[...])                       # f32
    qkv = jnp.dot(ln1.astype(bf16), wqkv_ref[...],
                  preferred_element_type=f32)                                # (M, 3E) f32
    qkv3 = qkv.reshape(NB, L, 3 * E)

    # causal mask (True = keep); diagonal always kept so softmax rows stay finite.
    row = jax.lax.broadcasted_iota(jnp.int32, (L, L), 0)
    col = jax.lax.broadcasted_iota(jnp.int32, (L, L), 1)
    keep = (col <= row)[None, :, :]                                          # (1, L, L)

    # Per-head attention.  Static Python loop (heads is small); each head's score
    # tensor dies at the end of its iteration, only the (NB, L, d) outputs stay live
    # until the single K=E projection below.
    head_outs = []
    for h in range(heads):
        qh = qkv3[:, :, h * d:(h + 1) * d] * scale    # scale folded into q (L*d elems)
        kh = qkv3[:, :, E + h * d:E + (h + 1) * d]
        vh = qkv3[:, :, 2 * E + h * d:2 * E + (h + 1) * d]

        s = jnp.einsum('bqd,bkd->bqk', qh.astype(bf16), kh.astype(bf16),
                       preferred_element_type=f32)                           # (NB, L, L)
        s = jnp.where(keep, s, -jnp.inf)
        m = jnp.max(s, axis=-1, keepdims=True)
        p = jnp.exp(s - m)                            # un-normalized, values in (0, 1]
        denom = jnp.sum(p, axis=-1, keepdims=True)    # (NB, L, 1), >= 1

        oh = jnp.einsum('bqk,bkd->bqd', p.astype(bf16), vh.astype(bf16),
                        preferred_element_type=f32)                          # (NB, L, d)
        # Deferred softmax normalization: L*d multiplies instead of L*L.
        oh = oh * pl.reciprocal(denom, approx=True)
        head_outs.append(oh)

    # Single full-K output projection: (M, E) @ (E, E) on the MXU.
    attn_cat = jnp.concatenate(head_outs, axis=-1).reshape(M, E)
    attn = jnp.dot(attn_cat.astype(bf16), wp_ref[...],
                   preferred_element_type=f32)                               # (M, E)

    x1 = x2 + attn                                    # first residual (f32)

    # ---- pre-FFN LayerNorm + MLP (Linear -> exact GELU -> Linear), hidden chunked ----
    ln2a = _layernorm(x1, ln2w_ref[...], ln2b_ref[...]).astype(bf16)
    H4 = w1_ref.shape[1]
    ffn = None
    for c in range(0, H4, ffn_chunk):                 # static loop; 1 chunk at small shapes
        h1 = jnp.dot(ln2a, w1_ref[:, c:c + ffn_chunk],
                     preferred_element_type=f32) + b1_ref[:, c:c + ffn_chunk]
        g = _gelu_exact(h1)                                                   # f32
        part = jnp.dot(g.astype(bf16), w2_ref[c:c + ffn_chunk, :],
                       preferred_element_type=f32)
        ffn = part if ffn is None else ffn + part
    ffn = ffn + b2_ref[...]

    # TODO(synk): attn_dropout / res_dropout are None (Identity) in this Block config,
    # so no stochastic dropout is implemented in-kernel.
    o_ref[...] = (x1 + ffn).reshape(NB, L, E).astype(o_ref.dtype)


# --------------------------------- wrapper -----------------------------------

def gpt_block(x, params, heads, batch_block=None, ffn_chunk=None,
              single_buffer_weights=True):
    B, L, E = x.shape
    H4 = params["w1_t"].shape[1]
    assert E % heads == 0
    bf16 = jnp.bfloat16

    # ---- generation detection + per-TC VMEM capacity -------------------------
    try:
        kind = jax.devices()[0].device_kind.lower()
    except Exception:
        kind = ""
    is_v7 = "v7" in kind
    is_v6 = "v6" in kind
    num_tc = 2 if is_v7 else 1                         # v7x has 2 TensorCores/chip
    try:
        vmem_cap = int(pltpu.get_tpu_info().vmem_capacity_bytes)
    except Exception:
        vmem_cap = (64 << 20) if is_v7 else (128 << 20)

    # ---- tiling heuristics (generation dependent) -----------------------------
    # v7x: keep M <= 512 so weights + activations fit in 64 MiB; v6e: push M toward
    # 2048 to amortize per-step overhead on the 2x256^2 MXU; v5e: 1024.
    target_m = 512 if is_v7 else (2048 if is_v6 else 1024)
    if batch_block is None:
        batch_block = 1
        for nb in range(B, 0, -1):
            if B % nb == 0 and nb * L <= target_m:
                batch_block = nb
                break
        # Keep >= num_tc grid steps so the "parallel" axis can shard across both
        # v7x TensorCores instead of collapsing to a single step.
        while num_tc > 1 and B // batch_block < num_tc and batch_block > 1:
            batch_block -= 1
            while batch_block > 1 and B % batch_block:
                batch_block -= 1
    assert B % batch_block == 0

    # FFN hidden-dim chunk (caps the live (M, 4E) activation at large shapes).
    max_ffn = 512 if is_v7 else 1024
    if ffn_chunk is None:
        ffn_chunk = H4
        if H4 > max_ffn:
            for c in (max_ffn, 512, 256, 128):
                if c <= max_ffn and H4 % c == 0:
                    ffn_chunk = c
                    break
    assert H4 % ffn_chunk == 0

    # Fused QKV weight + bf16 weight casts (halves weight DMA bytes & VMEM footprint).
    wqkv = jnp.concatenate(
        [params["wq_t"], params["wk_t"], params["wv_t"]], axis=1).astype(bf16)  # (E, 3E)
    wp = params["wp_t"].astype(bf16)                                            # (E, E)
    w1 = params["w1_t"].astype(bf16)                                            # (E, 4E)
    w2 = params["w2_t"].astype(bf16)                                            # (4E, E)

    # ---- VMEM budget: request what we need, never more than capacity - headroom ----
    nbl = batch_block * L
    weight_bytes = 2 * (E * 3 * E + E * E + E * H4 + H4 * E) \
        + 4 * (4 * E + 2 * H4 + E)                    # bf16 mats + f32 LN params/biases
    # ~2 heads' score tensors live at once (not all heads), plus the (M, *) activations.
    act_bytes = 4 * nbl * (9 * E + 2 * ffn_chunk) + 4 * 2 * batch_block * L * L
    io_bytes = 4 * 2 * 2 * nbl * E                    # double-buffered x / out blocks
    cap = max(vmem_cap - (16 << 20), 16 << 20)        # ~48 MiB on v7x, ~112 MiB v5e/v6e

    def vmem_budget(weight_mult):
        need = weight_mult * weight_bytes + act_bytes + io_bytes + (6 << 20)
        return int(max(min(need, cap), min(32 << 20, cap)))

    def build(single_buf):
        wmode = {"pipeline_mode": pl.Buffered(1)} if single_buf else {}

        def full(shape):
            return pl.BlockSpec(shape, lambda b: (0,) * len(shape), **wmode)

        return pl.pallas_call(
            functools.partial(block_kernel, heads, ffn_chunk),
            out_shape=jax.ShapeDtypeStruct((B, L, E), x.dtype),
            grid_spec=pltpu.PrefetchScalarGridSpec(
                num_scalar_prefetch=0,
                grid=(B // batch_block,),
                in_specs=[
                    pl.BlockSpec((batch_block, L, E), lambda b: (b, 0, 0)),  # x
                    full((1, E)), full((1, E)),                              # ln1 w / b (f32)
                    full((E, 3 * E)),                                        # fused Wqkv^T (bf16)
                    full((E, E)),                                            # Wproj^T (bf16)
                    full((1, E)), full((1, E)),                              # ln2 w / b (f32)
                    full((E, H4)), full((1, H4)),                            # W1^T (bf16), b1 (f32)
                    full((H4, E)), full((1, E)),                             # W2^T (bf16), b2 (f32)
                ],
                out_specs=pl.BlockSpec((batch_block, L, E), lambda b: (b, 0, 0)),
            ),
            compiler_params=pltpu.CompilerParams(
                dimension_semantics=("parallel",),
                vmem_limit_bytes=vmem_budget(1 if single_buf else 2)),
        )

    args = (x,
            params["ln1_w"], params["ln1_b"],
            wqkv, wp,
            params["ln2_w"], params["ln2_b"],
            w1, params["b1"], w2, params["b2"])

    if single_buffer_weights:
        try:
            # Constant index_maps -> the weights are DMA'd once; Buffered(1) drops the
            # useless second pipeline buffer (halves resident weight VMEM).
            return jax.block_until_ready(build(True)(*args))
        except Exception:
            pass  # older jax without pipeline_mode support -> default double buffering
    return build(False)(*args)


# ----------------------------- plain-JAX reference ----------------------------

def _gelu_erf_ref(x):
    return 0.5 * x * (1.0 + jax.lax.erf(x / math.sqrt(2.0)))


def gpt_block_ref(x, params, heads, matmul_dtype=jnp.float32):
    """Plain-JAX reference.  matmul_dtype=jnp.bfloat16 mirrors the kernel's bf16 matmul
    operands (with f32 accumulation); matmul_dtype=jnp.float32 is the exact module math."""
    B, L, E = x.shape
    d = E // heads
    cast = lambda t: t.astype(matmul_dtype)
    mm = lambda a, b: jnp.dot(cast(a), cast(b), preferred_element_type=jnp.float32)

    def ln(z, w, b):
        mu = jnp.mean(z, axis=-1, keepdims=True)
        var = jnp.mean((z - mu) ** 2, axis=-1, keepdims=True)
        return (z - mu) * jax.lax.rsqrt(var + 1e-5) * w + b

    h = ln(x, params["ln1_w"], params["ln1_b"])
    q = mm(h, params["wq_t"])
    k = mm(h, params["wk_t"])
    v = mm(h, params["wv_t"])
    split = lambda t: t.reshape(B, L, heads, d).transpose(0, 2, 1, 3)   # (B, H, L, d)
    q, k, v = split(q), split(k), split(v)
    s = jnp.einsum("bhld,bhmd->bhlm", cast(q / math.sqrt(d)), cast(k),
                   preferred_element_type=jnp.float32)
    mask = jnp.tril(jnp.ones((L, L))) == 0
    s = jnp.where(mask[None, None], -jnp.inf, s)
    p = jax.nn.softmax(s, axis=-1)
    o = jnp.einsum("bhlm,bhmd->bhld", cast(p), cast(v),
                   preferred_element_type=jnp.float32)
    o = mm(o.transpose(0, 2, 1, 3).reshape(B, L, E), params["wp_t"])
    x = x + o
    g = ln(x, params["ln2_w"], params["ln2_b"])
    f = mm(g, params["w1_t"]) + params["b1"]
    f = _gelu_erf_ref(f)
    f = mm(f, params["w2_t"]) + params["b2"]
    return x + f


# ----------------------------------- main -------------------------------------

if __name__ == "__main__":
    B, L, E, HEADS = 2, 8, 32, 4
    H4 = 4 * E

    key = jax.random.PRNGKey(0)
    ks = jax.random.split(key, 9)

    def uinit(k, shape, fan_in):
        bound = 1.0 / math.sqrt(fan_in)
        return jax.random.uniform(k, shape, jnp.float32, -bound, bound)

    # Linear weights stored pre-transposed: [in_features, out_features].
    params = {
        "ln1_w": jnp.ones((1, E), jnp.float32),
        "ln1_b": jnp.zeros((1, E), jnp.float32),
        "wq_t": uinit(ks[0], (E, E), E),
        "wk_t": uinit(ks[1], (E, E), E),
        "wv_t": uinit(ks[2], (E, E), E),
        "wp_t": uinit(ks[3], (E, E), E),
        "ln2_w": jnp.ones((1, E), jnp.float32),
        "ln2_b": jnp.zeros((1, E), jnp.float32),
        "w1_t": uinit(ks[4], (E, H4), E),
        "b1": uinit(ks[5], (1, H4), E),
        "w2_t": uinit(ks[6], (H4, E), H4),
        "b2": uinit(ks[7], (1, E), H4),
    }

    x = jax.random.normal(ks[8], (B, L, E), jnp.float32)

    out = jax.block_until_ready(gpt_block(x, params, HEADS))
    assert out.shape == (B, L, E)

    # Matched-precision reference (bf16 matmul operands, f32 accumulation, like the kernel).
    ref_bf16 = gpt_block_ref(x, params, HEADS, matmul_dtype=jnp.bfloat16)
    err_bf16 = jnp.max(jnp.abs(out - ref_bf16))
    assert jnp.allclose(out, ref_bf16, rtol=2e-2, atol=2e-2), (
        f"max abs err vs matched-precision ref: {err_bf16}")

    # Exact float32 module math; tolerance loosened to cover the bf16 MXU operands.
    ref_f32 = gpt_block_ref(x, params, HEADS, matmul_dtype=jnp.float32)
    err_f32 = jnp.max(jnp.abs(out - ref_f32))
    assert jnp.allclose(out, ref_f32, rtol=5e-2, atol=5e-2), (
        f"max abs err vs f32 ref: {err_f32}")

    print("KERNEL_OK")
</pallas_src>

<mosaic_0001>
module attributes {stable_mosaic.version = 11 : i64} {
  func.func @block_kernel(%arg0: i32, %arg1: memref<2x8x32xf32, #tpu.memory_space<vmem>>, %arg2: memref<1x32xf32, #tpu.memory_space<vmem>>, %arg3: memref<1x32xf32, #tpu.memory_space<vmem>>, %arg4: memref<32x96xbf16, #tpu.memory_space<vmem>>, %arg5: memref<32x32xbf16, #tpu.memory_space<vmem>>, %arg6: memref<1x32xf32, #tpu.memory_space<vmem>>, %arg7: memref<1x32xf32, #tpu.memory_space<vmem>>, %arg8: memref<32x128xbf16, #tpu.memory_space<vmem>>, %arg9: memref<1x128xf32, #tpu.memory_space<vmem>>, %arg10: memref<128x32xbf16, #tpu.memory_space<vmem>>, %arg11: memref<1x32xf32, #tpu.memory_space<vmem>>, %arg12: memref<2x8x32xf32, #tpu.memory_space<vmem>>) attributes {dimension_semantics = [#tpu.dimension_semantics<parallel>], iteration_bounds = array<i64: 1>, scalar_prefetch = 0 : i64, scratch_operands = 0 : i64, tpu.core_type = #tpu.core_type<tc>, window_params = [{transform_indices = @transform_0, window_bounds = array<i64: 2, 8, 32>}, {pipeline_mode = #tpu.pipeline_mode<synchronous>, transform_indices = @transform_1, window_bounds = array<i64: 1, 32>}, {pipeline_mode = #tpu.pipeline_mode<synchronous>, transform_indices = @transform_2, window_bounds = array<i64: 1, 32>}, {pipeline_mode = #tpu.pipeline_mode<synchronous>, transform_indices = @transform_3, window_bounds = array<i64: 32, 96>}, {pipeline_mode = #tpu.pipeline_mode<synchronous>, transform_indices = @transform_4, window_bounds = array<i64: 32, 32>}, {pipeline_mode = #tpu.pipeline_mode<synchronous>, transform_indices = @transform_5, window_bounds = array<i64: 1, 32>}, {pipeline_mode = #tpu.pipeline_mode<synchronous>, transform_indices = @transform_6, window_bounds = array<i64: 1, 32>}, {pipeline_mode = #tpu.pipeline_mode<synchronous>, transform_indices = @transform_7, window_bounds = array<i64: 32, 128>}, {pipeline_mode = #tpu.pipeline_mode<synchronous>, transform_indices = @transform_8, window_bounds = array<i64: 1, 128>}, {pipeline_mode = #tpu.pipeline_mode<synchronous>, transform_indices = @transform_9, window_bounds = array<i64: 128, 32>}, {pipeline_mode = #tpu.pipeline_mode<synchronous>, transform_indices = @transform_10, window_bounds = array<i64: 1, 32>}, {transform_indices = @transform_11, window_bounds = array<i64: 2, 8, 32>}]} {
    %c0 = arith.constant 0 : index
    %c0_0 = arith.constant 0 : index
    %c0_1 = arith.constant 0 : index
    %0 = vector.load %arg1[%c0, %c0_0, %c0_1] : memref<2x8x32xf32, #tpu.memory_space<vmem>>, vector<2x8x32xf32>
    %1 = vector.shape_cast %0 : vector<2x8x32xf32> to vector<16x32xf32>
    %c0_2 = arith.constant 0 : index
    %c0_3 = arith.constant 0 : index
    %2 = vector.load %arg2[%c0_2, %c0_3] : memref<1x32xf32, #tpu.memory_space<vmem>>, vector<1x32xf32>
    %c0_4 = arith.constant 0 : index
    %c0_5 = arith.constant 0 : index
    %3 = vector.load %arg3[%c0_4, %c0_5] : memref<1x32xf32, #tpu.memory_space<vmem>>, vector<1x32xf32>
    %cst = arith.constant dense<0.000000e+00> : vector<16xf32>
    %4 = vector.multi_reduction <add>, %1, %cst [1] : vector<16x32xf32> to vector<16xf32>
    %5 = vector.shape_cast %4 : vector<16xf32> to vector<16x1xf32>
    %cst_6 = arith.constant 3.200000e+01 : f32
    %6 = vector.broadcast %cst_6 : f32 to vector<16x1xf32>
    %7 = arith.divf %5, %6 : vector<16x1xf32>
    %8 = vector.broadcast %7 : vector<16x1xf32> to vector<16x32xf32>
    %9 = arith.subf %1, %8 : vector<16x32xf32>
    %10 = vector.broadcast %7 : vector<16x1xf32> to vector<16x32xf32>
    %11 = arith.subf %1, %10 : vector<16x32xf32>
    %12 = arith.mulf %9, %11 : vector<16x32xf32>
    %cst_7 = arith.constant dense<0.000000e+00> : vector<16xf32>
    %13 = vector.multi_reduction <add>, %12, %cst_7 [1] : vector<16x32xf32> to vector<16xf32>
    %14 = vector.shape_cast %13 : vector<16xf32> to vector<16x1xf32>
    %cst_8 = arith.constant 3.200000e+01 : f32
    %15 = vector.broadcast %cst_8 : f32 to vector<16x1xf32>
    %16 = arith.divf %14, %15 : vector<16x1xf32>
    %17 = vector.broadcast %7 : vector<16x1xf32> to vector<16x32xf32>
    %18 = arith.subf %1, %17 : vector<16x32xf32>
    %cst_9 = arith.constant 9.99999974E-6 : f32
    %19 = vector.broadcast %cst_9 : f32 to vector<16x1xf32>
    %20 = arith.addf %16, %19 : vector<16x1xf32>
    %21 = math.rsqrt %20 : vector<16x1xf32>
    %22 = vector.broadcast %21 : vector<16x1xf32> to vector<16x32xf32>
    %23 = arith.mulf %18, %22 : vector<16x32xf32>
    %24 = vector.broadcast %2 : vector<1x32xf32> to vector<16x32xf32>
    %25 = arith.mulf %23, %24 : vector<16x32xf32>
    %26 = vector.broadcast %3 : vector<1x32xf32> to vector<16x32xf32>
    %27 = arith.addf %25, %26 : vector<16x32xf32>
    %28 = arith.truncf %27 : vector<16x32xf32> to vector<16x32xbf16>
    %c0_10 = arith.constant 0 : index
    %c0_11 = arith.constant 0 : index
    %29 = vector.load %arg4[%c0_10, %c0_11] : memref<32x96xbf16, #tpu.memory_space<vmem>>, vector<32x96xbf16>
    %cst_12 = arith.constant dense<0.000000e+00> : vector<16x96xf32>
    %30 = tpu.matmul %28, %29, %cst_12 {dimension_numbers = #tpu.dot_dimension_numbers<[1], [0], [0], [1], [0, 0, 1, 1], [], []>} : vector<16x32xbf16>, vector<32x96xbf16>, vector<16x96xf32> -> vector<16x96xf32>
    %31 = vector.shape_cast %30 : vector<16x96xf32> to vector<2x8x96xf32>
    %32 = tpu.iota {dimensions = array<i32: 0>} : vector<8x8xi32>
    %33 = tpu.iota {dimensions = array<i32: 1>} : vector<8x8xi32>
    %34 = arith.cmpi sle, %33, %32 : vector<8x8xi32>
    %35 = vector.shape_cast %34 : vector<8x8xi1> to vector<1x8x8xi1>
    %36 = vector.extract_strided_slice %31 {offsets = [0, 0, 0], sizes = [2, 8, 8], strides = [1, 1, 1]} : vector<2x8x96xf32> to vector<2x8x8xf32>
    %cst_13 = arith.constant 0.353553385 : f32
    %37 = vector.broadcast %cst_13 : f32 to vector<2x8x8xf32>
    %38 = arith.mulf %36, %37 : vector<2x8x8xf32>
    %39 = vector.extract_strided_slice %31 {offsets = [0, 0, 32], sizes = [2, 8, 8], strides = [1, 1, 1]} : vector<2x8x96xf32> to vector<2x8x8xf32>
    %40 = vector.extract_strided_slice %31 {offsets = [0, 0, 64], sizes = [2, 8, 8], strides = [1, 1, 1]} : vector<2x8x96xf32> to vector<2x8x8xf32>
    %41 = arith.truncf %38 : vector<2x8x8xf32> to vector<2x8x8xbf16>
    %42 = arith.truncf %39 : vector<2x8x8xf32> to vector<2x8x8xbf16>
    "tpu.trace_start"() <{level = 10 : i32, message = "bqd,bkd->bqk"}> : () -> ()
    %cst_14 = arith.constant dense<0.000000e+00> : vector<2x8x8xf32>
    %43 = tpu.matmul %41, %42, %cst_14 {dimension_numbers = #tpu.dot_dimension_numbers<[2], [2], [1], [1], [0, 0, 0, 1, 1, 1], [0], [0]>} : vector<2x8x8xbf16>, vector<2x8x8xbf16>, vector<2x8x8xf32> -> vector<2x8x8xf32>
    %cst_15 = arith.constant 0xFF800000 : f32
    "tpu.trace_stop"() : () -> ()
    %44 = vector.shape_cast %35 : vector<1x8x8xi1> to vector<1x8x8xi1>
    %45 = vector.broadcast %44 : vector<1x8x8xi1> to vector<2x8x8xi1>
    %46 = vector.broadcast %cst_15 : f32 to vector<2x8x8xf32>
    %47 = arith.select %45, %43, %46 : vector<2x8x8xi1>, vector<2x8x8xf32>
    %cst_16 = arith.constant dense<0xFF800000> : vector<2x8xf32>
    %48 = vector.multi_reduction <maximumf>, %47, %cst_16 [2] : vector<2x8x8xf32> to vector<2x8xf32>
    %49 = vector.shape_cast %48 : vector<2x8xf32> to vector<2x8x1xf32>
    %50 = vector.broadcast %49 : vector<2x8x1xf32> to vector<2x8x8xf32>
    %51 = arith.subf %47, %50 : vector<2x8x8xf32>
    %52 = math.exp %51 : vector<2x8x8xf32>
    %cst_17 = arith.constant dense<0.000000e+00> : vector<2x8xf32>
    %53 = vector.multi_reduction <add>, %52, %cst_17 [2] : vector<2x8x8xf32> to vector<2x8xf32>
    %54 = vector.shape_cast %53 : vector<2x8xf32> to vector<2x8x1xf32>
    %55 = arith.truncf %52 : vector<2x8x8xf32> to vector<2x8x8xbf16>
    %56 = arith.truncf %40 : vector<2x8x8xf32> to vector<2x8x8xbf16>
    "tpu.trace_start"() <{level = 10 : i32, message = "bqk,bkd->bqd"}> : () -> ()
    %cst_18 = arith.constant dense<0.000000e+00> : vector<2x8x8xf32>
    %57 = tpu.matmul %55, %56, %cst_18 {dimension_numbers = #tpu.dot_dimension_numbers<[2], [1], [1], [2], [0, 0, 0, 1, 1, 2], [0], [0]>} : vector<2x8x8xbf16>, vector<2x8x8xbf16>, vector<2x8x8xf32> -> vector<2x8x8xf32>
    "tpu.trace_stop"() : () -> ()
    %58 = tpu.reciprocal %54 {approx = true} : vector<2x8x1xf32> -> vector<2x8x1xf32>
    %59 = vector.broadcast %58 : vector<2x8x1xf32> to vector<2x8x8xf32>
    %60 = arith.mulf %57, %59 : vector<2x8x8xf32>
    %61 = vector.extract_strided_slice %31 {offsets = [0, 0, 8], sizes = [2, 8, 8], strides = [1, 1, 1]} : vector<2x8x96xf32> to vector<2x8x8xf32>
    %cst_19 = arith.constant 0.353553385 : f32
    %62 = vector.broadcast %cst_19 : f32 to vector<2x8x8xf32>
    %63 = arith.mulf %61, %62 : vector<2x8x8xf32>
    %64 = vector.extract_strided_slice %31 {offsets = [0, 0, 40], sizes = [2, 8, 8], strides = [1, 1, 1]} : vector<2x8x96xf32> to vector<2x8x8xf32>
    %65 = vector.extract_strided_slice %31 {offsets = [0, 0, 72], sizes = [2, 8, 8], strides = [1, 1, 1]} : vector<2x8x96xf32> to vector<2x8x8xf32>
    %66 = arith.truncf %63 : vector<2x8x8xf32> to vector<2x8x8xbf16>
    %67 = arith.truncf %64 : vector<2x8x8xf32> to vector<2x8x8xbf16>
    "tpu.trace_start"() <{level = 10 : i32, message = "bqd,bkd->bqk"}> : () -> ()
    %cst_20 = arith.constant dense<0.000000e+00> : vector<2x8x8xf32>
    %68 = tpu.matmul %66, %67, %cst_20 {dimension_numbers = #tpu.dot_dimension_numbers<[2], [2], [1], [1], [0, 0, 0, 1, 1, 1], [0], [0]>} : vector<2x8x8xbf16>, vector<2x8x8xbf16>, vector<2x8x8xf32> -> vector<2x8x8xf32>
    %cst_21 = arith.constant 0xFF800000 : f32
    "tpu.trace_stop"() : () -> ()
    %69 = vector.shape_cast %35 : vector<1x8x8xi1> to vector<1x8x8xi1>
    %70 = vector.broadcast %69 : vector<1x8x8xi1> to vector<2x8x8xi1>
    %71 = vector.broadcast %cst_21 : f32 to vector<2x8x8xf32>
    %72 = arith.select %70, %68, %71 : vector<2x8x8xi1>, vector<2x8x8xf32>
    %cst_22 = arith.constant dense<0xFF800000> : vector<2x8xf32>
    %73 = vector.multi_reduction <maximumf>, %72, %cst_22 [2] : vector<2x8x8xf32> to vector<2x8xf32>
    %74 = vector.shape_cast %73 : vector<2x8xf32> to vector<2x8x1xf32>
    %75 = vector.broadcast %74 : vector<2x8x1xf32> to vector<2x8x8xf32>
    %76 = arith.subf %72, %75 : vector<2x8x8xf32>
    %77 = math.exp %76 : vector<2x8x8xf32>
    %cst_23 = arith.constant dense<0.000000e+00> : vector<2x8xf32>
    %78 = vector.multi_reduction <add>, %77, %cst_23 [2] : vector<2x8x8xf32> to vector<2x8xf32>
    %79 = vector.shape_cast %78 : vector<2x8xf32> to vector<2x8x1xf32>
    %80 = arith.truncf %77 : vector<2x8x8xf32> to vector<2x8x8xbf16>
    %81 = arith.truncf %65 : vector<2x8x8xf32> to vector<2x8x8xbf16>
    "tpu.trace_start"() <{level = 10 : i32, message = "bqk,bkd->bqd"}> : () -> ()
    %cst_24 = arith.constant dense<0.000000e+00> : vector<2x8x8xf32>
    %82 = tpu.matmul %80, %81, %cst_24 {dimension_numbers = #tpu.dot_dimension_numbers<[2], [1], [1], [2], [0, 0, 0, 1, 1, 2], [0], [0]>} : vector<2x8x8xbf16>, vector<2x8x8xbf16>, vector<2x8x8xf32> -> vector<2x8x8xf32>
    "tpu.trace_stop"() : () -> ()
    %83 = tpu.reciprocal %79 {approx = true} : vector<2x8x1xf32> -> vector<2x8x1xf32>
    %84 = vector.broadcast %83 : vector<2x8x1xf32> to vector<2x8x8xf32>
    %85 = arith.mulf %82, %84 : vector<2x8x8xf32>
    %86 = vector.extract_strided_slice %31 {offsets = [0, 0, 16], sizes = [2, 8, 8], strides = [1, 1, 1]} : vector<2x8x96xf32> to vector<2x8x8xf32>
    %cst_25 = arith.constant 0.353553385 : f32
    %87 = vector.broadcast %cst_25 : f32 to vector<2x8x8xf32>
    %88 = arith.mulf %86, %87 : vector<2x8x8xf32>
    %89 = vector.extract_strided_slice %31 {offsets = [0, 0, 48], sizes = [2, 8, 8], strides = [1, 1, 1]} : vector<2x8x96xf32> to vector<2x8x8xf32>
    %90 = vector.extract_strided_slice %31 {offsets = [0, 0, 80], sizes = [2, 8, 8], strides = [1, 1, 1]} : vector<2x8x96xf32> to vector<2x8x8xf32>
    %91 = arith.truncf %88 : vector<2x8x8xf32> to vector<2x8x8xbf16>
    %92 = arith.truncf %89 : vector<2x8x8xf32> to vector<2x8x8xbf16>
    "tpu.trace_start"() <{level = 10 : i32, message = "bqd,bkd->bqk"}> : () -> ()
    %cst_26 = arith.constant dense<0.000000e+00> : vector<2x8x8xf32>
    %93 = tpu.matmul %91, %92, %cst_26 {dimension_numbers = #tpu.dot_dimension_numbers<[2], [2], [1], [1], [0, 0, 0, 1, 1, 1], [0], [0]>} : vector<2x8x8xbf16>, vector<2x8x8xbf16>, vector<2x8x8xf32> -> vector<2x8x8xf32>
    %cst_27 = arith.constant 0xFF800000 : f32
    "tpu.trace_stop"() : () -> ()
    %94 = vector.shape_cast %35 : vector<1x8x8xi1> to vector<1x8x8xi1>
    %95 = vector.broadcast %94 : vector<1x8x8xi1> to vector<2x8x8xi1>
    %96 = vector.broadcast %cst_27 : f32 to vector<2x8x8xf32>
    %97 = arith.select %95, %93, %96 : vector<2x8x8xi1>, vector<2x8x8xf32>
    %cst_28 = arith.constant dense<0xFF800000> : vector<2x8xf32>
    %98 = vector.multi_reduction <maximumf>, %97, %cst_28 [2] : vector<2x8x8xf32> to vector<2x8xf32>
    %99 = vector.shape_cast %98 : vector<2x8xf32> to vector<2x8x1xf32>
    %100 = vector.broadcast %99 : vector<2x8x1xf32> to vector<2x8x8xf32>
    %101 = arith.subf %97, %100 : vector<2x8x8xf32>
    %102 = math.exp %101 : vector<2x8x8xf32>
    %cst_29 = arith.constant dense<0.000000e+00> : vector<2x8xf32>
    %103 = vector.multi_reduction <add>, %102, %cst_29 [2] : vector<2x8x8xf32> to vector<2x8xf32>
    %104 = vector.shape_cast %103 : vector<2x8xf32> to vector<2x8x1xf32>
    %105 = arith.truncf %102 : vector<2x8x8xf32> to vector<2x8x8xbf16>
    %106 = arith.truncf %90 : vector<2x8x8xf32> to vector<2x8x8xbf16>
    "tpu.trace_start"() <{level = 10 : i32, message = "bqk,bkd->bqd"}> : () -> ()
    %cst_30 = arith.constant dense<0.000000e+00> : vector<2x8x8xf32>
    %107 = tpu.matmul %105, %106, %cst_30 {dimension_numbers = #tpu.dot_dimension_numbers<[2], [1], [1], [2], [0, 0, 0, 1, 1, 2], [0], [0]>} : vector<2x8x8xbf16>, vector<2x8x8xbf16>, vector<2x8x8xf32> -> vector<2x8x8xf32>
    "tpu.trace_stop"() : () -> ()
    %108 = tpu.reciprocal %104 {approx = true} : vector<2x8x1xf32> -> vector<2x8x1xf32>
    %109 = vector.broadcast %108 : vector<2x8x1xf32> to vector<2x8x8xf32>
    %110 = arith.mulf %107, %109 : vector<2x8x8xf32>
    %111 = vector.extract_strided_slice %31 {offsets = [0, 0, 24], sizes = [2, 8, 8], strides = [1, 1, 1]} : vector<2x8x96xf32> to vector<2x8x8xf32>
    %cst_31 = arith.constant 0.353553385 : f32
    %112 = vector.broadcast %cst_31 : f32 to vector<2x8x8xf32>
    %113 = arith.mulf %111, %112 : vector<2x8x8xf32>
    %114 = vector.extract_strided_slice %31 {offsets = [0, 0, 56], sizes = [2, 8, 8], strides = [1, 1, 1]} : vector<2x8x96xf32> to vector<2x8x8xf32>
    %115 = vector.extract_strided_slice %31 {offsets = [0, 0, 88], sizes = [2, 8, 8], strides = [1, 1, 1]} : vector<2x8x96xf32> to vector<2x8x8xf32>
    %116 = arith.truncf %113 : vector<2x8x8xf32> to vector<2x8x8xbf16>
    %117 = arith.truncf %114 : vector<2x8x8xf32> to vector<2x8x8xbf16>
    "tpu.trace_start"() <{level = 10 : i32, message = "bqd,bkd->bqk"}> : () -> ()
    %cst_32 = arith.constant dense<0.000000e+00> : vector<2x8x8xf32>
    %118 = tpu.matmul %116, %117, %cst_32 {dimension_numbers = #tpu.dot_dimension_numbers<[2], [2], [1], [1], [0, 0, 0, 1, 1, 1], [0], [0]>} : vector<2x8x8xbf16>, vector<2x8x8xbf16>, vector<2x8x8xf32> -> vector<2x8x8xf32>
    %cst_33 = arith.constant 0xFF800000 : f32
    "tpu.trace_stop"() : () -> ()
    %119 = vector.shape_cast %35 : vector<1x8x8xi1> to vector<1x8x8xi1>
    %120 = vector.broadcast %119 : vector<1x8x8xi1> to vector<2x8x8xi1>
    %121 = vector.broadcast %cst_33 : f32 to vector<2x8x8xf32>
    %122 = arith.select %120, %118, %121 : vector<2x8x8xi1>, vector<2x8x8xf32>
    %cst_34 = arith.constant dense<0xFF800000> : vector<2x8xf32>
    %123 = vector.multi_reduction <maximumf>, %122, %cst_34 [2] : vector<2x8x8xf32> to vector<2x8xf32>
    %124 = vector.shape_cast %123 : vector<2x8xf32> to vector<2x8x1xf32>
    %125 = vector.broadcast %124 : vector<2x8x1xf32> to vector<2x8x8xf32>
    %126 = arith.subf %122, %125 : vector<2x8x8xf32>
    %127 = math.exp %126 : vector<2x8x8xf32>
    %cst_35 = arith.constant dense<0.000000e+00> : vector<2x8xf32>
    %128 = vector.multi_reduction <add>, %127, %cst_35 [2] : vector<2x8x8xf32> to vector<2x8xf32>
    %129 = vector.shape_cast %128 : vector<2x8xf32> to vector<2x8x1xf32>
    %130 = arith.truncf %127 : vector<2x8x8xf32> to vector<2x8x8xbf16>
    %131 = arith.truncf %115 : vector<2x8x8xf32> to vector<2x8x8xbf16>
    "tpu.trace_start"() <{level = 10 : i32, message = "bqk,bkd->bqd"}> : () -> ()
    %cst_36 = arith.constant dense<0.000000e+00> : vector<2x8x8xf32>
    %132 = tpu.matmul %130, %131, %cst_36 {dimension_numbers = #tpu.dot_dimension_numbers<[2], [1], [1], [2], [0, 0, 0, 1, 1, 2], [0], [0]>} : vector<2x8x8xbf16>, vector<2x8x8xbf16>, vector<2x8x8xf32> -> vector<2x8x8xf32>
    "tpu.trace_stop"() : () -> ()
    %133 = tpu.reciprocal %129 {approx = true} : vector<2x8x1xf32> -> vector<2x8x1xf32>
    %134 = vector.broadcast %133 : vector<2x8x1xf32> to vector<2x8x8xf32>
    %135 = arith.mulf %132, %134 : vector<2x8x8xf32>
    %136 = tpu.concatenate %60, %85, %110, %135 in 2 : vector<2x8x8xf32>, vector<2x8x8xf32>, vector<2x8x8xf32>, vector<2x8x8xf32> -> vector<2x8x32xf32>
    %137 = vector.shape_cast %136 : vector<2x8x32xf32> to vector<16x32xf32>
    %138 = arith.truncf %137 : vector<16x32xf32> to vector<16x32xbf16>
    %c0_37 = arith.constant 0 : index
    %c0_38 = arith.constant 0 : index
    %139 = vector.load %arg5[%c0_37, %c0_38] : memref<32x32xbf16, #tpu.memory_space<vmem>>, vector<32x32xbf16>
    %cst_39 = arith.constant dense<0.000000e+00> : vector<16x32xf32>
    %140 = tpu.matmul %138, %139, %cst_39 {dimension_numbers = #tpu.dot_dimension_numbers<[1], [0], [0], [1], [0, 0, 1, 1], [], []>} : vector<16x32xbf16>, vector<32x32xbf16>, vector<16x32xf32> -> vector<16x32xf32>
    %141 = arith.addf %1, %140 : vector<16x32xf32>
    %c0_40 = arith.constant 0 : index
    %c0_41 = arith.constant 0 : index
    %142 = vector.load %arg6[%c0_40, %c0_41] : memref<1x32xf32, #tpu.memory_space<vmem>>, vector<1x32xf32>
    %c0_42 = arith.constant 0 : index
    %c0_43 = arith.constant 0 : index
    %143 = vector.load %arg7[%c0_42, %c0_43] : memref<1x32xf32, #tpu.memory_space<vmem>>, vector<1x32xf32>
    %cst_44 = arith.constant dense<0.000000e+00> : vector<16xf32>
    %144 = vector.multi_reduction <add>, %141, %cst_44 [1] : vector<16x32xf32> to vector<16xf32>
    %145 = vector.shape_cast %144 : vector<16xf32> to vector<16x1xf32>
    %cst_45 = arith.constant 3.200000e+01 : f32
    %146 = vector.broadcast %cst_45 : f32 to vector<16x1xf32>
    %147 = arith.divf %145, %146 : vector<16x1xf32>
    %148 = vector.broadcast %147 : vector<16x1xf32> to vector<16x32xf32>
    %149 = arith.subf %141, %148 : vector<16x32xf32>
    %150 = vector.broadcast %147 : vector<16x1xf32> to vector<16x32xf32>
    %151 = arith.subf %141, %150 : vector<16x32xf32>
    %152 = arith.mulf %149, %151 : vector<16x32xf32>
    %cst_46 = arith.constant dense<0.000000e+00> : vector<16xf32>
    %153 = vector.multi_reduction <add>, %152, %cst_46 [1] : vector<16x32xf32> to vector<16xf32>
    %154 = vector.shape_cast %153 : vector<16xf32> to vector<16x1xf32>
    %cst_47 = arith.constant 3.200000e+01 : f32
    %155 = vector.broadcast %cst_47 : f32 to vector<16x1xf32>
    %156 = arith.divf %154, %155 : vector<16x1xf32>
    %157 = vector.broadcast %147 : vector<16x1xf32> to vector<16x32xf32>
    %158 = arith.subf %141, %157 : vector<16x32xf32>
    %cst_48 = arith.constant 9.99999974E-6 : f32
    %159 = vector.broadcast %cst_48 : f32 to vector<16x1xf32>
    %160 = arith.addf %156, %159 : vector<16x1xf32>
    %161 = math.rsqrt %160 : vector<16x1xf32>
    %162 = vector.broadcast %161 : vector<16x1xf32> to vector<16x32xf32>
    %163 = arith.mulf %158, %162 : vector<16x32xf32>
    %164 = vector.broadcast %142 : vector<1x32xf32> to vector<16x32xf32>
    %165 = arith.mulf %163, %164 : vector<16x32xf32>
    %166 = vector.broadcast %143 : vector<1x32xf32> to vector<16x32xf32>
    %167 = arith.addf %165, %166 : vector<16x32xf32>
    %168 = arith.truncf %167 : vector<16x32xf32> to vector<16x32xbf16>
    %c0_49 = arith.constant 0 : index
    %c0_50 = arith.constant 0 : index
    %169 = vector.load %arg8[%c0_49, %c0_50] : memref<32x128xbf16, #tpu.memory_space<vmem>>, vector<32x128xbf16>
    %cst_51 = arith.constant dense<0.000000e+00> : vector<16x128xf32>
    %170 = tpu.matmul %168, %169, %cst_51 {dimension_numbers = #tpu.dot_dimension_numbers<[1], [0], [0], [1], [0, 0, 1, 1], [], []>} : vector<16x32xbf16>, vector<32x128xbf16>, vector<16x128xf32> -> vector<16x128xf32>
    %c0_52 = arith.constant 0 : index
    %c0_53 = arith.constant 0 : index
    %171 = vector.load %arg9[%c0_52, %c0_53] : memref<1x128xf32, #tpu.memory_space<vmem>>, vector<1x128xf32>
    %172 = vector.broadcast %171 : vector<1x128xf32> to vector<16x128xf32>
    %173 = arith.addf %170, %172 : vector<16x128xf32>
    %cst_54 = arith.constant 5.000000e-01 : f32
    %174 = vector.broadcast %cst_54 : f32 to vector<16x128xf32>
    %175 = arith.mulf %174, %173 : vector<16x128xf32>
    %cst_55 = arith.constant 0.707106769 : f32
    %176 = vector.broadcast %cst_55 : f32 to vector<16x128xf32>
    %177 = arith.mulf %173, %176 : vector<16x128xf32>
    %178 = math.absf %177 : vector<16x128xf32>
    %cst_56 = arith.constant 0.327591091 : f32
    %179 = vector.broadcast %cst_56 : f32 to vector<16x128xf32>
    %180 = arith.mulf %179, %178 : vector<16x128xf32>
    %cst_57 = arith.constant 1.000000e+00 : f32
    %181 = vector.broadcast %cst_57 : f32 to vector<16x128xf32>
    %182 = arith.addf %181, %180 : vector<16x128xf32>
    %183 = tpu.reciprocal %182 {approx = true} : vector<16x128xf32> -> vector<16x128xf32>
    %cst_58 = arith.constant 1.06140542 : f32
    %184 = vector.broadcast %cst_58 : f32 to vector<16x128xf32>
    %185 = arith.mulf %184, %183 : vector<16x128xf32>
    %cst_59 = arith.constant -1.45315206 : f32
    %186 = vector.broadcast %cst_59 : f32 to vector<16x128xf32>
    %187 = arith.addf %185, %186 : vector<16x128xf32>
    %188 = arith.mulf %187, %183 : vector<16x128xf32>
    %cst_60 = arith.constant 1.42141378 : f32
    %189 = vector.broadcast %cst_60 : f32 to vector<16x128xf32>
    %190 = arith.addf %188, %189 : vector<16x128xf32>
    %191 = arith.mulf %190, %183 : vector<16x128xf32>
    %cst_61 = arith.constant -0.284496725 : f32
    %192 = vector.broadcast %cst_61 : f32 to vector<16x128xf32>
    %193 = arith.addf %191, %192 : vector<16x128xf32>
    %194 = arith.mulf %193, %183 : vector<16x128xf32>
    %cst_62 = arith.constant 0.254829586 : f32
    %195 = vector.broadcast %cst_62 : f32 to vector<16x128xf32>
    %196 = arith.addf %194, %195 : vector<16x128xf32>
    %197 = arith.mulf %196, %183 : vector<16x128xf32>
    %cst_63 = arith.constant 0.000000e+00 : f32
    %198 = vector.broadcast %cst_63 : f32 to vector<16x128xf32>
    %199 = arith.subf %198, %178 : vector<16x128xf32>
    %200 = arith.mulf %199, %178 : vector<16x128xf32>
    %201 = math.exp %200 : vector<16x128xf32>
    %202 = arith.mulf %197, %201 : vector<16x128xf32>
    %cst_64 = arith.constant 1.000000e+00 : f32
    %203 = vector.broadcast %cst_64 : f32 to vector<16x128xf32>
    %204 = arith.subf %203, %202 : vector<16x128xf32>
    %cst_65 = arith.constant 0.000000e+00 : f32
    %205 = vector.broadcast %cst_65 : f32 to vector<16x128xf32>
    %206 = arith.cmpf oge, %177, %205 : vector<16x128xf32>
    %cst_66 = arith.constant 0.000000e+00 : f32
    %207 = vector.broadcast %cst_66 : f32 to vector<16x128xf32>
    %208 = arith.subf %207, %204 : vector<16x128xf32>
    %209 = arith.select %206, %204, %208 : vector<16x128xi1>, vector<16x128xf32>
    %cst_67 = arith.constant 1.000000e+00 : f32
    %210 = vector.broadcast %cst_67 : f32 to vector<16x128xf32>
    %211 = arith.addf %210, %209 : vector<16x128xf32>
    %212 = arith.mulf %175, %211 : vector<16x128xf32>
    %213 = arith.truncf %212 : vector<16x128xf32> to vector<16x128xbf16>
    %c0_68 = arith.constant 0 : index
    %c0_69 = arith.constant 0 : index
    %214 = vector.load %arg10[%c0_68, %c0_69] : memref<128x32xbf16, #tpu.memory_space<vmem>>, vector<128x32xbf16>
    %cst_70 = arith.constant dense<0.000000e+00> : vector<16x32xf32>
    %215 = tpu.matmul %213, %214, %cst_70 {dimension_numbers = #tpu.dot_dimension_numbers<[1], [0], [0], [1], [0, 0, 1, 1], [], []>} : vector<16x128xbf16>, vector<128x32xbf16>, vector<16x32xf32> -> vector<16x32xf32>
    %c0_71 = arith.constant 0 : index
    %c0_72 = arith.constant 0 : index
    %216 = vector.load %arg11[%c0_71, %c0_72] : memref<1x32xf32, #tpu.memory_space<vmem>>, vector<1x32xf32>
    %217 = vector.broadcast %216 : vector<1x32xf32> to vector<16x32xf32>
    %218 = arith.addf %215, %217 : vector<16x32xf32>
    %219 = arith.addf %141, %218 : vector<16x32xf32>
    %220 = vector.shape_cast %219 : vector<16x32xf32> to vector<2x8x32xf32>
    %c0_73 = arith.constant 0 : index
    %c0_74 = arith.constant 0 : index
    %c0_75 = arith.constant 0 : index
    %221 = vector.load %arg12[%c0_73, %c0_74, %c0_75] : memref<2x8x32xf32, #tpu.memory_space<vmem>>, vector<2x8x32xf32>
    tpu.vector_store %arg12[%c0_73, %c0_74, %c0_75], %220 {strides = array<i32>} : memref<2x8x32xf32, #tpu.memory_space<vmem>>, vector<2x8x32xf32>,
    return
  }
  func.func @transform_0(%arg0: i32) -> (i32, i32, i32) {
    %c0_i32 = arith.constant 0 : i32
    %c0_i32_0 = arith.constant 0 : i32
    %c0_i32_1 = arith.constant 0 : i32
    return %arg0, %c0_i32, %c0_i32_0 : i32, i32, i32
  }
  func.func @transform_1(%arg0: i32) -> (i32, i32) {
    %c0_i32 = arith.constant 0 : i32
    %c0_i32_0 = arith.constant 0 : i32
    %c0_i32_1 = arith.constant 0 : i32
    return %c0_i32, %c0_i32_0 : i32, i32
  }
  func.func @transform_2(%arg0: i32) -> (i32, i32) {
    %c0_i32 = arith.constant 0 : i32
    %c0_i32_0 = arith.constant 0 : i32
    %c0_i32_1 = arith.constant 0 : i32
    return %c0_i32, %c0_i32_0 : i32, i32
  }
  func.func @transform_3(%arg0: i32) -> (i32, i32) {
    %c0_i32 = arith.constant 0 : i32
    %c0_i32_0 = arith.constant 0 : i32
    %c0_i32_1 = arith.constant 0 : i32
    return %c0_i32, %c0_i32_0 : i32, i32
  }
  func.func @transform_4(%arg0: i32) -> (i32, i32) {
    %c0_i32 = arith.constant 0 : i32
    %c0_i32_0 = arith.constant 0 : i32
    %c0_i32_1 = arith.constant 0 : i32
    return %c0_i32, %c0_i32_0 : i32, i32
  }
  func.func @transform_5(%arg0: i32) -> (i32, i32) {
    %c0_i32 = arith.constant 0 : i32
    %c0_i32_0 = arith.constant 0 : i32
    %c0_i32_1 = arith.constant 0 : i32
    return %c0_i32, %c0_i32_0 : i32, i32
  }
  func.func @transform_6(%arg0: i32) -> (i32, i32) {
    %c0_i32 = arith.constant 0 : i32
    %c0_i32_0 = arith.constant 0 : i32
    %c0_i32_1 = arith.constant 0 : i32
    return %c0_i32, %c0_i32_0 : i32, i32
  }
  func.func @transform_7(%arg0: i32) -> (i32, i32) {
    %c0_i32 = arith.constant 0 : i32
    %c0_i32_0 = arith.constant 0 : i32
    %c0_i32_1 = arith.constant 0 : i32
    return %c0_i32, %c0_i32_0 : i32, i32
  }
  func.func @transform_8(%arg0: i32) -> (i32, i32) {
    %c0_i32 = arith.constant 0 : i32
    %c0_i32_0 = arith.constant 0 : i32
    %c0_i32_1 = arith.constant 0 : i32
    return %c0_i32, %c0_i32_0 : i32, i32
  }
  func.func @transform_9(%arg0: i32) -> (i32, i32) {
    %c0_i32 = arith.constant 0 : i32
    %c0_i32_0 = arith.constant 0 : i32
    %c0_i32_1 = arith.constant 0 : i32
    return %c0_i32, %c0_i32_0 : i32, i32
  }
  func.func @transform_10(%arg0: i32) -> (i32, i32) {
    %c0_i32 = arith.constant 0 : i32
    %c0_i32_0 = arith.constant 0 : i32
    %c0_i32_1 = arith.constant 0 : i32
    return %c0_i32, %c0_i32_0 : i32, i32
  }
  func.func @transform_11(%arg0: i32) -> (i32, i32, i32) {
    %c0_i32 = arith.constant 0 : i32
    %c0_i32_0 = arith.constant 0 : i32
    %c0_i32_1 = arith.constant 0 : i32
    return %arg0, %c0_i32, %c0_i32_0 : i32, i32, i32
  }
}

module attributes {stable_mosaic.version = 11 : i64} {
  func.func @block_kernel(%arg0: i32, %arg1: memref<2x8x32xf32, #tpu.memory_space<vmem>>, %arg2: memref<1x32xf32, #tpu.memory_space<vmem>>, %arg3: memref<1x32xf32, #tpu.memory_space<vmem>>, %arg4: memref<32x96xbf16, #tpu.memory_space<vmem>>, %arg5: memref<32x32xbf16, #tpu.memory_space<vmem>>, %arg6: memref<1x32xf32, #tpu.memory_space<vmem>>, %arg7: memref<1x32xf32, #tpu.memory_space<vmem>>, %arg8: memref<32x128xbf16, #tpu.memory_space<vmem>>, %arg9: memref<1x128xf32, #tpu.memory_space<vmem>>, %arg10: memref<128x32xbf16, #tpu.memory_space<vmem>>, %arg11: memref<1x32xf32, #tpu.memory_space<vmem>>, %arg12: memref<2x8x32xf32, #tpu.memory_space<vmem>>) attributes {dimension_semantics = [#tpu.dimension_semantics<parallel>], iteration_bounds = array<i64: 1>, scalar_prefetch = 0 : i64, scratch_operands = 0 : i64, tpu.core_type = #tpu.core_type<tc>, window_params = [{transform_indices = @transform_0, window_bounds = array<i64: 2, 8, 32>}, {pipeline_mode = #tpu.pipeline_mode<synchronous>, transform_indices = @transform_1, window_bounds = array<i64: 1, 32>}, {pipeline_mode = #tpu.pipeline_mode<synchronous>, transform_indices = @transform_2, window_bounds = array<i64: 1, 32>}, {pipeline_mode = #tpu.pipeline_mode<synchronous>, transform_indices = @transform_3, window_bounds = array<i64: 32, 96>}, {pipeline_mode = #tpu.pipeline_mode<synchronous>, transform_indices = @transform_4, window_bounds = array<i64: 32, 32>}, {pipeline_mode = #tpu.pipeline_mode<synchronous>, transform_indices = @transform_5, window_bounds = array<i64: 1, 32>}, {pipeline_mode = #tpu.pipeline_mode<synchronous>, transform_indices = @transform_6, window_bounds = array<i64: 1, 32>}, {pipeline_mode = #tpu.pipeline_mode<synchronous>, transform_indices = @transform_7, window_bounds = array<i64: 32, 128>}, {pipeline_mode = #tpu.pipeline_mode<synchronous>, transform_indices = @transform_8, window_bounds = array<i64: 1, 128>}, {pipeline_mode = #tpu.pipeline_mode<synchronous>, transform_indices = @transform_9, window_bounds = array<i64: 128, 32>}, {pipeline_mode = #tpu.pipeline_mode<synchronous>, transform_indices = @transform_10, window_bounds = array<i64: 1, 32>}, {transform_indices = @transform_11, window_bounds = array<i64: 2, 8, 32>}]} {
    %c0 = arith.constant 0 : index
    %c0_0 = arith.constant 0 : index
    %c0_1 = arith.constant 0 : index
    %0 = vector.load %arg1[%c0, %c0_0, %c0_1] : memref<2x8x32xf32, #tpu.memory_space<vmem>>, vector<2x8x32xf32>
    %1 = vector.shape_cast %0 : vector<2x8x32xf32> to vector<16x32xf32>
    %c0_2 = arith.constant 0 : index
    %c0_3 = arith.constant 0 : index
    %2 = vector.load %arg2[%c0_2, %c0_3] : memref<1x32xf32, #tpu.memory_space<vmem>>, vector<1x32xf32>
    %c0_4 = arith.constant 0 : index
    %c0_5 = arith.constant 0 : index
    %3 = vector.load %arg3[%c0_4, %c0_5] : memref<1x32xf32, #tpu.memory_space<vmem>>, vector<1x32xf32>
    %cst = arith.constant dense<0.000000e+00> : vector<16xf32>
    %4 = vector.multi_reduction <add>, %1, %cst [1] : vector<16x32xf32> to vector<16xf32>
    %5 = vector.shape_cast %4 : vector<16xf32> to vector<16x1xf32>
    %cst_6 = arith.constant 3.200000e+01 : f32
    %6 = vector.broadcast %cst_6 : f32 to vector<16x1xf32>
    %7 = arith.divf %5, %6 : vector<16x1xf32>
    %8 = vector.broadcast %7 : vector<16x1xf32> to vector<16x32xf32>
    %9 = arith.subf %1, %8 : vector<16x32xf32>
    %10 = vector.broadcast %7 : vector<16x1xf32> to vector<16x32xf32>
    %11 = arith.subf %1, %10 : vector<16x32xf32>
    %12 = arith.mulf %9, %11 : vector<16x32xf32>
    %cst_7 = arith.constant dense<0.000000e+00> : vector<16xf32>
    %13 = vector.multi_reduction <add>, %12, %cst_7 [1] : vector<16x32xf32> to vector<16xf32>
    %14 = vector.shape_cast %13 : vector<16xf32> to vector<16x1xf32>
    %cst_8 = arith.constant 3.200000e+01 : f32
    %15 = vector.broadcast %cst_8 : f32 to vector<16x1xf32>
    %16 = arith.divf %14, %15 : vector<16x1xf32>
    %17 = vector.broadcast %7 : vector<16x1xf32> to vector<16x32xf32>
    %18 = arith.subf %1, %17 : vector<16x32xf32>
    %cst_9 = arith.constant 9.99999974E-6 : f32
    %19 = vector.broadcast %cst_9 : f32 to vector<16x1xf32>
    %20 = arith.addf %16, %19 : vector<16x1xf32>
    %21 = math.rsqrt %20 : vector<16x1xf32>
    %22 = vector.broadcast %21 : vector<16x1xf32> to vector<16x32xf32>
    %23 = arith.mulf %18, %22 : vector<16x32xf32>
    %24 = vector.broadcast %2 : vector<1x32xf32> to vector<16x32xf32>
    %25 = arith.mulf %23, %24 : vector<16x32xf32>
    %26 = vector.broadcast %3 : vector<1x32xf32> to vector<16x32xf32>
    %27 = arith.addf %25, %26 : vector<16x32xf32>
    %28 = arith.truncf %27 : vector<16x32xf32> to vector<16x32xbf16>
    %c0_10 = arith.constant 0 : index
    %c0_11 = arith.constant 0 : index
    %29 = vector.load %arg4[%c0_10, %c0_11] : memref<32x96xbf16, #tpu.memory_space<vmem>>, vector<32x96xbf16>
    %cst_12 = arith.constant dense<0.000000e+00> : vector<16x96xf32>
    %30 = tpu.matmul %28, %29, %cst_12 {dimension_numbers = #tpu.dot_dimension_numbers<[1], [0], [0], [1], [0, 0, 1, 1], [], []>} : vector<16x32xbf16>, vector<32x96xbf16>, vector<16x96xf32> -> vector<16x96xf32>
    %31 = vector.shape_cast %30 : vector<16x96xf32> to vector<2x8x96xf32>
    %32 = tpu.iota {dimensions = array<i32: 0>} : vector<8x8xi32>
    %33 = tpu.iota {dimensions = array<i32: 1>} : vector<8x8xi32>
    %34 = arith.cmpi sle, %33, %32 : vector<8x8xi32>
    %35 = vector.shape_cast %34 : vector<8x8xi1> to vector<1x8x8xi1>
    %36 = vector.extract_strided_slice %31 {offsets = [0, 0, 0], sizes = [2, 8, 8], strides = [1, 1, 1]} : vector<2x8x96xf32> to vector<2x8x8xf32>
    %cst_13 = arith.constant 0.353553385 : f32
    %37 = vector.broadcast %cst_13 : f32 to vector<2x8x8xf32>
    %38 = arith.mulf %36, %37 : vector<2x8x8xf32>
    %39 = vector.extract_strided_slice %31 {offsets = [0, 0, 32], sizes = [2, 8, 8], strides = [1, 1, 1]} : vector<2x8x96xf32> to vector<2x8x8xf32>
    %40 = vector.extract_strided_slice %31 {offsets = [0, 0, 64], sizes = [2, 8, 8], strides = [1, 1, 1]} : vector<2x8x96xf32> to vector<2x8x8xf32>
    %41 = arith.truncf %38 : vector<2x8x8xf32> to vector<2x8x8xbf16>
    %42 = arith.truncf %39 : vector<2x8x8xf32> to vector<2x8x8xbf16>
    "tpu.trace_start"() <{level = 10 : i32, message = "bqd,bkd->bqk"}> : () -> ()
    %cst_14 = arith.constant dense<0.000000e+00> : vector<2x8x8xf32>
    %43 = tpu.matmul %41, %42, %cst_14 {dimension_numbers = #tpu.dot_dimension_numbers<[2], [2], [1], [1], [0, 0, 0, 1, 1, 1], [0], [0]>} : vector<2x8x8xbf16>, vector<2x8x8xbf16>, vector<2x8x8xf32> -> vector<2x8x8xf32>
    %cst_15 = arith.constant 0xFF800000 : f32
    "tpu.trace_stop"() : () -> ()
    %44 = vector.shape_cast %35 : vector<1x8x8xi1> to vector<1x8x8xi1>
    %45 = vector.broadcast %44 : vector<1x8x8xi1> to vector<2x8x8xi1>
    %46 = vector.broadcast %cst_15 : f32 to vector<2x8x8xf32>
    %47 = arith.select %45, %43, %46 : vector<2x8x8xi1>, vector<2x8x8xf32>
    %cst_16 = arith.constant dense<0xFF800000> : vector<2x8xf32>
    %48 = vector.multi_reduction <maximumf>, %47, %cst_16 [2] : vector<2x8x8xf32> to vector<2x8xf32>
    %49 = vector.shape_cast %48 : vector<2x8xf32> to vector<2x8x1xf32>
    %50 = vector.broadcast %49 : vector<2x8x1xf32> to vector<2x8x8xf32>
    %51 = arith.subf %47, %50 : vector<2x8x8xf32>
    %52 = math.exp %51 : vector<2x8x8xf32>
    %cst_17 = arith.constant dense<0.000000e+00> : vector<2x8xf32>
    %53 = vector.multi_reduction <add>, %52, %cst_17 [2] : vector<2x8x8xf32> to vector<2x8xf32>
    %54 = vector.shape_cast %53 : vector<2x8xf32> to vector<2x8x1xf32>
    %55 = arith.truncf %52 : vector<2x8x8xf32> to vector<2x8x8xbf16>
    %56 = arith.truncf %40 : vector<2x8x8xf32> to vector<2x8x8xbf16>
    "tpu.trace_start"() <{level = 10 : i32, message = "bqk,bkd->bqd"}> : () -> ()
    %cst_18 = arith.constant dense<0.000000e+00> : vector<2x8x8xf32>
    %57 = tpu.matmul %55, %56, %cst_18 {dimension_numbers = #tpu.dot_dimension_numbers<[2], [1], [1], [2], [0, 0, 0, 1, 1, 2], [0], [0]>} : vector<2x8x8xbf16>, vector<2x8x8xbf16>, vector<2x8x8xf32> -> vector<2x8x8xf32>
    "tpu.trace_stop"() : () -> ()
    %58 = tpu.reciprocal %54 {approx = true} : vector<2x8x1xf32> -> vector<2x8x1xf32>
    %59 = vector.broadcast %58 : vector<2x8x1xf32> to vector<2x8x8xf32>
    %60 = arith.mulf %57, %59 : vector<2x8x8xf32>
    %61 = vector.extract_strided_slice %31 {offsets = [0, 0, 8], sizes = [2, 8, 8], strides = [1, 1, 1]} : vector<2x8x96xf32> to vector<2x8x8xf32>
    %cst_19 = arith.constant 0.353553385 : f32
    %62 = vector.broadcast %cst_19 : f32 to vector<2x8x8xf32>
    %63 = arith.mulf %61, %62 : vector<2x8x8xf32>
    %64 = vector.extract_strided_slice %31 {offsets = [0, 0, 40], sizes = [2, 8, 8], strides = [1, 1, 1]} : vector<2x8x96xf32> to vector<2x8x8xf32>
    %65 = vector.extract_strided_slice %31 {offsets = [0, 0, 72], sizes = [2, 8, 8], strides = [1, 1, 1]} : vector<2x8x96xf32> to vector<2x8x8xf32>
    %66 = arith.truncf %63 : vector<2x8x8xf32> to vector<2x8x8xbf16>
    %67 = arith.truncf %64 : vector<2x8x8xf32> to vector<2x8x8xbf16>
    "tpu.trace_start"() <{level = 10 : i32, message = "bqd,bkd->bqk"}> : () -> ()
    %cst_20 = arith.constant dense<0.000000e+00> : vector<2x8x8xf32>
    %68 = tpu.matmul %66, %67, %cst_20 {dimension_numbers = #tpu.dot_dimension_numbers<[2], [2], [1], [1], [0, 0, 0, 1, 1, 1], [0], [0]>} : vector<2x8x8xbf16>, vector<2x8x8xbf16>, vector<2x8x8xf32> -> vector<2x8x8xf32>
    %cst_21 = arith.constant 0xFF800000 : f32
    "tpu.trace_stop"() : () -> ()
    %69 = vector.shape_cast %35 : vector<1x8x8xi1> to vector<1x8x8xi1>
    %70 = vector.broadcast %69 : vector<1x8x8xi1> to vector<2x8x8xi1>
    %71 = vector.broadcast %cst_21 : f32 to vector<2x8x8xf32>
    %72 = arith.select %70, %68, %71 : vector<2x8x8xi1>, vector<2x8x8xf32>
    %cst_22 = arith.constant dense<0xFF800000> : vector<2x8xf32>
    %73 = vector.multi_reduction <maximumf>, %72, %cst_22 [2] : vector<2x8x8xf32> to vector<2x8xf32>
    %74 = vector.shape_cast %73 : vector<2x8xf32> to vector<2x8x1xf32>
    %75 = vector.broadcast %74 : vector<2x8x1xf32> to vector<2x8x8xf32>
    %76 = arith.subf %72, %75 : vector<2x8x8xf32>
    %77 = math.exp %76 : vector<2x8x8xf32>
    %cst_23 = arith.constant dense<0.000000e+00> : vector<2x8xf32>
    %78 = vector.multi_reduction <add>, %77, %cst_23 [2] : vector<2x8x8xf32> to vector<2x8xf32>
    %79 = vector.shape_cast %78 : vector<2x8xf32> to vector<2x8x1xf32>
    %80 = arith.truncf %77 : vector<2x8x8xf32> to vector<2x8x8xbf16>
    %81 = arith.truncf %65 : vector<2x8x8xf32> to vector<2x8x8xbf16>
    "tpu.trace_start"() <{level = 10 : i32, message = "bqk,bkd->bqd"}> : () -> ()
    %cst_24 = arith.constant dense<0.000000e+00> : vector<2x8x8xf32>
    %82 = tpu.matmul %80, %81, %cst_24 {dimension_numbers = #tpu.dot_dimension_numbers<[2], [1], [1], [2], [0, 0, 0, 1, 1, 2], [0], [0]>} : vector<2x8x8xbf16>, vector<2x8x8xbf16>, vector<2x8x8xf32> -> vector<2x8x8xf32>
    "tpu.trace_stop"() : () -> ()
    %83 = tpu.reciprocal %79 {approx = true} : vector<2x8x1xf32> -> vector<2x8x1xf32>
    %84 = vector.broadcast %83 : vector<2x8x1xf32> to vector<2x8x8xf32>
    %85 = arith.mulf %82, %84 : vector<2x8x8xf32>
    %86 = vector.extract_strided_slice %31 {offsets = [0, 0, 16], sizes = [2, 8, 8], strides = [1, 1, 1]} : vector<2x8x96xf32> to vector<2x8x8xf32>
    %cst_25 = arith.constant 0.353553385 : f32
    %87 = vector.broadcast %cst_25 : f32 to vector<2x8x8xf32>
    %88 = arith.mulf %86, %87 : vector<2x8x8xf32>
    %89 = vector.extract_strided_slice %31 {offsets = [0, 0, 48], sizes = [2, 8, 8], strides = [1, 1, 1]} : vector<2x8x96xf32> to vector<2x8x8xf32>
    %90 = vector.extract_strided_slice %31 {offsets = [0, 0, 80], sizes = [2, 8, 8], strides = [1, 1, 1]} : vector<2x8x96xf32> to vector<2x8x8xf32>
    %91 = arith.truncf %88 : vector<2x8x8xf32> to vector<2x8x8xbf16>
    %92 = arith.truncf %89 : vector<2x8x8xf32> to vector<2x8x8xbf16>
    "tpu.trace_start"() <{level = 10 : i32, message = "bqd,bkd->bqk"}> : () -> ()
    %cst_26 = arith.constant dense<0.000000e+00> : vector<2x8x8xf32>
    %93 = tpu.matmul %91, %92, %cst_26 {dimension_numbers = #tpu.dot_dimension_numbers<[2], [2], [1], [1], [0, 0, 0, 1, 1, 1], [0], [0]>} : vector<2x8x8xbf16>, vector<2x8x8xbf16>, vector<2x8x8xf32> -> vector<2x8x8xf32>
    %cst_27 = arith.constant 0xFF800000 : f32
    "tpu.trace_stop"() : () -> ()
    %94 = vector.shape_cast %35 : vector<1x8x8xi1> to vector<1x8x8xi1>
    %95 = vector.broadcast %94 : vector<1x8x8xi1> to vector<2x8x8xi1>
    %96 = vector.broadcast %cst_27 : f32 to vector<2x8x8xf32>
    %97 = arith.select %95, %93, %96 : vector<2x8x8xi1>, vector<2x8x8xf32>
    %cst_28 = arith.constant dense<0xFF800000> : vector<2x8xf32>
    %98 = vector.multi_reduction <maximumf>, %97, %cst_28 [2] : vector<2x8x8xf32> to vector<2x8xf32>
    %99 = vector.shape_cast %98 : vector<2x8xf32> to vector<2x8x1xf32>
    %100 = vector.broadcast %99 : vector<2x8x1xf32> to vector<2x8x8xf32>
    %101 = arith.subf %97, %100 : vector<2x8x8xf32>
    %102 = math.exp %101 : vector<2x8x8xf32>
    %cst_29 = arith.constant dense<0.000000e+00> : vector<2x8xf32>
    %103 = vector.multi_reduction <add>, %102, %cst_29 [2] : vector<2x8x8xf32> to vector<2x8xf32>
    %104 = vector.shape_cast %103 : vector<2x8xf32> to vector<2x8x1xf32>
    %105 = arith.truncf %102 : vector<2x8x8xf32> to vector<2x8x8xbf16>
    %106 = arith.truncf %90 : vector<2x8x8xf32> to vector<2x8x8xbf16>
    "tpu.trace_start"() <{level = 10 : i32, message = "bqk,bkd->bqd"}> : () -> ()
    %cst_30 = arith.constant dense<0.000000e+00> : vector<2x8x8xf32>
    %107 = tpu.matmul %105, %106, %cst_30 {dimension_numbers = #tpu.dot_dimension_numbers<[2], [1], [1], [2], [0, 0, 0, 1, 1, 2], [0], [0]>} : vector<2x8x8xbf16>, vector<2x8x8xbf16>, vector<2x8x8xf32> -> vector<2x8x8xf32>
    "tpu.trace_stop"() : () -> ()
    %108 = tpu.reciprocal %104 {approx = true} : vector<2x8x1xf32> -> vector<2x8x1xf32>
    %109 = vector.broadcast %108 : vector<2x8x1xf32> to vector<2x8x8xf32>
    %110 = arith.mulf %107, %109 : vector<2x8x8xf32>
    %111 = vector.extract_strided_slice %31 {offsets = [0, 0, 24], sizes = [2, 8, 8], strides = [1, 1, 1]} : vector<2x8x96xf32> to vector<2x8x8xf32>
    %cst_31 = arith.constant 0.353553385 : f32
    %112 = vector.broadcast %cst_31 : f32 to vector<2x8x8xf32>
    %113 = arith.mulf %111, %112 : vector<2x8x8xf32>
    %114 = vector.extract_strided_slice %31 {offsets = [0, 0, 56], sizes = [2, 8, 8], strides = [1, 1, 1]} : vector<2x8x96xf32> to vector<2x8x8xf32>
    %115 = vector.extract_strided_slice %31 {offsets = [0, 0, 88], sizes = [2, 8, 8], strides = [1, 1, 1]} : vector<2x8x96xf32> to vector<2x8x8xf32>
    %116 = arith.truncf %113 : vector<2x8x8xf32> to vector<2x8x8xbf16>
    %117 = arith.truncf %114 : vector<2x8x8xf32> to vector<2x8x8xbf16>
    "tpu.trace_start"() <{level = 10 : i32, message = "bqd,bkd->bqk"}> : () -> ()
    %cst_32 = arith.constant dense<0.000000e+00> : vector<2x8x8xf32>
    %118 = tpu.matmul %116, %117, %cst_32 {dimension_numbers = #tpu.dot_dimension_numbers<[2], [2], [1], [1], [0, 0, 0, 1, 1, 1], [0], [0]>} : vector<2x8x8xbf16>, vector<2x8x8xbf16>, vector<2x8x8xf32> -> vector<2x8x8xf32>
    %cst_33 = arith.constant 0xFF800000 : f32
    "tpu.trace_stop"() : () -> ()
    %119 = vector.shape_cast %35 : vector<1x8x8xi1> to vector<1x8x8xi1>
    %120 = vector.broadcast %119 : vector<1x8x8xi1> to vector<2x8x8xi1>
    %121 = vector.broadcast %cst_33 : f32 to vector<2x8x8xf32>
    %122 = arith.select %120, %118, %121 : vector<2x8x8xi1>, vector<2x8x8xf32>
    %cst_34 = arith.constant dense<0xFF800000> : vector<2x8xf32>
    %123 = vector.multi_reduction <maximumf>, %122, %cst_34 [2] : vector<2x8x8xf32> to vector<2x8xf32>
    %124 = vector.shape_cast %123 : vector<2x8xf32> to vector<2x8x1xf32>
    %125 = vector.broadcast %124 : vector<2x8x1xf32> to vector<2x8x8xf32>
    %126 = arith.subf %122, %125 : vector<2x8x8xf32>
    %127 = math.exp %126 : vector<2x8x8xf32>
    %cst_35 = arith.constant dense<0.000000e+00> : vector<2x8xf32>
    %128 = vector.multi_reduction <add>, %127, %cst_35 [2] : vector<2x8x8xf32> to vector<2x8xf32>
    %129 = vector.shape_cast %128 : vector<2x8xf32> to vector<2x8x1xf32>
    %130 = arith.truncf %127 : vector<2x8x8xf32> to vector<2x8x8xbf16>
    %131 = arith.truncf %115 : vector<2x8x8xf32> to vector<2x8x8xbf16>
    "tpu.trace_start"() <{level = 10 : i32, message = "bqk,bkd->bqd"}> : () -> ()
    %cst_36 = arith.constant dense<0.000000e+00> : vector<2x8x8xf32>
    %132 = tpu.matmul %130, %131, %cst_36 {dimension_numbers = #tpu.dot_dimension_numbers<[2], [1], [1], [2], [0, 0, 0, 1, 1, 2], [0], [0]>} : vector<2x8x8xbf16>, vector<2x8x8xbf16>, vector<2x8x8xf32> -> vector<2x8x8xf32>
    "tpu.trace_stop"() : () -> ()
    %133 = tpu.reciprocal %129 {approx = true} : vector<2x8x1xf32> -> vector<2x8x1xf32>
    %134 = vector.broadcast %133 : vector<2x8x1xf32> to vector<2x8x8xf32>
    %135 = arith.mulf %132, %134 : vector<2x8x8xf32>
    %136 = tpu.concatenate %60, %85, %110, %135 in 2 : vector<2x8x8xf32>, vector<2x8x8xf32>, vector<2x8x8xf32>, vector<2x8x8xf32> -> vector<2x8x32xf32>
    %137 = vector.shape_cast %136 : vector<2x8x32xf32> to vector<16x32xf32>
    %138 = arith.truncf %137 : vector<16x32xf32> to vector<16x32xbf16>
    %c0_37 = arith.constant 0 : index
    %c0_38 = arith.constant 0 : index
    %139 = vector.load %arg5[%c0_37, %c0_38] : memref<32x32xbf16, #tpu.memory_space<vmem>>, vector<32x32xbf16>
    %cst_39 = arith.constant dense<0.000000e+00> : vector<16x32xf32>
    %140 = tpu.matmul %138, %139, %cst_39 {dimension_numbers = #tpu.dot_dimension_numbers<[1], [0], [0], [1], [0, 0, 1, 1], [], []>} : vector<16x32xbf16>, vector<32x32xbf16>, vector<16x32xf32> -> vector<16x32xf32>
    %141 = arith.addf %1, %140 : vector<16x32xf32>
    %c0_40 = arith.constant 0 : index
    %c0_41 = arith.constant 0 : index
    %142 = vector.load %arg6[%c0_40, %c0_41] : memref<1x32xf32, #tpu.memory_space<vmem>>, vector<1x32xf32>
    %c0_42 = arith.constant 0 : index
    %c0_43 = arith.constant 0 : index
    %143 = vector.load %arg7[%c0_42, %c0_43] : memref<1x32xf32, #tpu.memory_space<vmem>>, vector<1x32xf32>
    %cst_44 = arith.constant dense<0.000000e+00> : vector<16xf32>
    %144 = vector.multi_reduction <add>, %141, %cst_44 [1] : vector<16x32xf32> to vector<16xf32>
    %145 = vector.shape_cast %144 : vector<16xf32> to vector<16x1xf32>
    %cst_45 = arith.constant 3.200000e+01 : f32
    %146 = vector.broadcast %cst_45 : f32 to vector<16x1xf32>
    %147 = arith.divf %145, %146 : vector<16x1xf32>
    %148 = vector.broadcast %147 : vector<16x1xf32> to vector<16x32xf32>
    %149 = arith.subf %141, %148 : vector<16x32xf32>
    %150 = vector.broadcast %147 : vector<16x1xf32> to vector<16x32xf32>
    %151 = arith.subf %141, %150 : vector<16x32xf32>
    %152 = arith.mulf %149, %151 : vector<16x32xf32>
    %cst_46 = arith.constant dense<0.000000e+00> : vector<16xf32>
    %153 = vector.multi_reduction <add>, %152, %cst_46 [1] : vector<16x32xf32> to vector<16xf32>
    %154 = vector.shape_cast %153 : vector<16xf32> to vector<16x1xf32>
    %cst_47 = arith.constant 3.200000e+01 : f32
    %155 = vector.broadcast %cst_47 : f32 to vector<16x1xf32>
    %156 = arith.divf %154, %155 : vector<16x1xf32>
    %157 = vector.broadcast %147 : vector<16x1xf32> to vector<16x32xf32>
    %158 = arith.subf %141, %157 : vector<16x32xf32>
    %cst_48 = arith.constant 9.99999974E-6 : f32
    %159 = vector.broadcast %cst_48 : f32 to vector<16x1xf32>
    %160 = arith.addf %156, %159 : vector<16x1xf32>
    %161 = math.rsqrt %160 : vector<16x1xf32>
    %162 = vector.broadcast %161 : vector<16x1xf32> to vector<16x32xf32>
    %163 = arith.mulf %158, %162 : vector<16x32xf32>
    %164 = vector.broadcast %142 : vector<1x32xf32> to vector<16x32xf32>
    %165 = arith.mulf %163, %164 : vector<16x32xf32>
    %166 = vector.broadcast %143 : vector<1x32xf32> to vector<16x32xf32>
    %167 = arith.addf %165, %166 : vector<16x32xf32>
    %168 = arith.truncf %167 : vector<16x32xf32> to vector<16x32xbf16>
    %c0_49 = arith.constant 0 : index
    %c0_50 = arith.constant 0 : index
    %169 = vector.load %arg8[%c0_49, %c0_50] : memref<32x128xbf16, #tpu.memory_space<vmem>>, vector<32x128xbf16>
    %cst_51 = arith.constant dense<0.000000e+00> : vector<16x128xf32>
    %170 = tpu.matmul %168, %169, %cst_51 {dimension_numbers = #tpu.dot_dimension_numbers<[1], [0], [0], [1], [0, 0, 1, 1], [], []>} : vector<16x32xbf16>, vector<32x128xbf16>, vector<16x128xf32> -> vector<16x128xf32>
    %c0_52 = arith.constant 0 : index
    %c0_53 = arith.constant 0 : index
    %171 = vector.load %arg9[%c0_52, %c0_53] : memref<1x128xf32, #tpu.memory_space<vmem>>, vector<1x128xf32>
    %172 = vector.broadcast %171 : vector<1x128xf32> to vector<16x128xf32>
    %173 = arith.addf %170, %172 : vector<16x128xf32>
    %cst_54 = arith.constant 5.000000e-01 : f32
    %174 = vector.broadcast %cst_54 : f32 to vector<16x128xf32>
    %175 = arith.mulf %174, %173 : vector<16x128xf32>
    %cst_55 = arith.constant 0.707106769 : f32
    %176 = vector.broadcast %cst_55 : f32 to vector<16x128xf32>
    %177 = arith.mulf %173, %176 : vector<16x128xf32>
    %178 = math.absf %177 : vector<16x128xf32>
    %cst_56 = arith.constant 0.327591091 : f32
    %179 = vector.broadcast %cst_56 : f32 to vector<16x128xf32>
    %180 = arith.mulf %179, %178 : vector<16x128xf32>
    %cst_57 = arith.constant 1.000000e+00 : f32
    %181 = vector.broadcast %cst_57 : f32 to vector<16x128xf32>
    %182 = arith.addf %181, %180 : vector<16x128xf32>
    %183 = tpu.reciprocal %182 {approx = true} : vector<16x128xf32> -> vector<16x128xf32>
    %cst_58 = arith.constant 1.06140542 : f32
    %184 = vector.broadcast %cst_58 : f32 to vector<16x128xf32>
    %185 = arith.mulf %184, %183 : vector<16x128xf32>
    %cst_59 = arith.constant -1.45315206 : f32
    %186 = vector.broadcast %cst_59 : f32 to vector<16x128xf32>
    %187 = arith.addf %185, %186 : vector<16x128xf32>
    %188 = arith.mulf %187, %183 : vector<16x128xf32>
    %cst_60 = arith.constant 1.42141378 : f32
    %189 = vector.broadcast %cst_60 : f32 to vector<16x128xf32>
    %190 = arith.addf %188, %189 : vector<16x128xf32>
    %191 = arith.mulf %190, %183 : vector<16x128xf32>
    %cst_61 = arith.constant -0.284496725 : f32
    %192 = vector.broadcast %cst_61 : f32 to vector<16x128xf32>
    %193 = arith.addf %191, %192 : vector<16x128xf32>
    %194 = arith.mulf %193, %183 : vector<16x128xf32>
    %cst_62 = arith.constant 0.254829586 : f32
    %195 = vector.broadcast %cst_62 : f32 to vector<16x128xf32>
    %196 = arith.addf %194, %195 : vector<16x128xf32>
    %197 = arith.mulf %196, %183 : vector<16x128xf32>
    %cst_63 = arith.constant 0.000000e+00 : f32
    %198 = vector.broadcast %cst_63 : f32 to vector<16x128xf32>
    %199 = arith.subf %198, %178 : vector<16x128xf32>
    %200 = arith.mulf %199, %178 : vector<16x128xf32>
    %201 = math.exp %200 : vector<16x128xf32>
    %202 = arith.mulf %197, %201 : vector<16x128xf32>
    %cst_64 = arith.constant 1.000000e+00 : f32
    %203 = vector.broadcast %cst_64 : f32 to vector<16x128xf32>
    %204 = arith.subf %203, %202 : vector<16x128xf32>
    %cst_65 = arith.constant 0.000000e+00 : f32
    %205 = vector.broadcast %cst_65 : f32 to vector<16x128xf32>
    %206 = arith.cmpf oge, %177, %205 : vector<16x128xf32>
    %cst_66 = arith.constant 0.000000e+00 : f32
    %207 = vector.broadcast %cst_66 : f32 to vector<16x128xf32>
    %208 = arith.subf %207, %204 : vector<16x128xf32>
    %209 = arith.select %206, %204, %208 : vector<16x128xi1>, vector<16x128xf32>
    %cst_67 = arith.constant 1.000000e+00 : f32
    %210 = vector.broadcast %cst_67 : f32 to vector<16x128xf32>
    %211 = arith.addf %210, %209 : vector<16x128xf32>
    %212 = arith.mulf %175, %211 : vector<16x128xf32>
    %213 = arith.truncf %212 : vector<16x128xf32> to vector<16x128xbf16>
    %c0_68 = arith.constant 0 : index
    %c0_69 = arith.constant 0 : index
    %214 = vector.load %arg10[%c0_68, %c0_69] : memref<128x32xbf16, #tpu.memory_space<vmem>>, vector<128x32xbf16>
    %cst_70 = arith.constant dense<0.000000e+00> : vector<16x32xf32>
    %215 = tpu.matmul %213, %214, %cst_70 {dimension_numbers = #tpu.dot_dimension_numbers<[1], [0], [0], [1], [0, 0, 1, 1], [], []>} : vector<16x128xbf16>, vector<128x32xbf16>, vector<16x32xf32> -> vector<16x32xf32>
    %c0_71 = arith.constant 0 : index
    %c0_72 = arith.constant 0 : index
    %216 = vector.load %arg11[%c0_71, %c0_72] : memref<1x32xf32, #tpu.memory_space<vmem>>, vector<1x32xf32>
    %217 = vector.broadcast %216 : vector<1x32xf32> to vector<16x32xf32>
    %218 = arith.addf %215, %217 : vector<16x32xf32>
    %219 = arith.addf %141, %218 : vector<16x32xf32>
    %220 = vector.shape_cast %219 : vector<16x32xf32> to vector<2x8x32xf32>
    %c0_73 = arith.constant 0 : index
    %c0_74 = arith.constant 0 : index
    %c0_75 = arith.constant 0 : index
    %221 = vector.load %arg12[%c0_73, %c0_74, %c0_75] : memref<2x8x32xf32, #tpu.memory_space<vmem>>, vector<2x8x32xf32>
    tpu.vector_store %arg12[%c0_73, %c0_74, %c0_75], %220 {strides = array<i32>} : memref<2x8x32xf32, #tpu.memory_space<vmem>>, vector<2x8x32xf32>,
    return
  }
  func.func @transform_0(%arg0: i32) -> (i32, i32, i32) {
    %c0_i32 = arith.constant 0 : i32
    %c0_i32_0 = arith.constant 0 : i32
    %c0_i32_1 = arith.constant 0 : i32
    return %arg0, %c0_i32, %c0_i32_0 : i32, i32, i32
  }
  func.func @transform_1(%arg0: i32) -> (i32, i32) {
    %c0_i32 = arith.constant 0 : i32
    %c0_i32_0 = arith.constant 0 : i32
    %c0_i32_1 = arith.constant 0 : i32
    return %c0_i32, %c0_i32_0 : i32, i32
  }
  func.func @transform_2(%arg0: i32) -> (i32, i32) {
    %c0_i32 = arith.constant 0 : i32
    %c0_i32_0 = arith.constant 0 : i32
    %c0_i32_1 = arith.constant 0 : i32
    return %c0_i32, %c0_i32_0 : i32, i32
  }
  func.func @transform_3(%arg0: i32) -> (i32, i32) {
    %c0_i32 = arith.constant 0 : i32
    %c0_i32_0 = arith.constant 0 : i32
    %c0_i32_1 = arith.constant 0 : i32
    return %c0_i32, %c0_i32_0 : i32, i32
  }
  func.func @transform_4(%arg0: i32) -> (i32, i32) {
    %c0_i32 = arith.constant 0 : i32
    %c0_i32_0 = arith.constant 0 : i32
    %c0_i32_1 = arith.constant 0 : i32
    return %c0_i32, %c0_i32_0 : i32, i32
  }
  func.func @transform_5(%arg0: i32) -> (i32, i32) {
    %c0_i32 = arith.constant 0 : i32
    %c0_i32_0 = arith.constant 0 : i32
    %c0_i32_1 = arith.constant 0 : i32
    return %c0_i32, %c0_i32_0 : i32, i32
  }
  func.func @transform_6(%arg0: i32) -> (i32, i32) {
    %c0_i32 = arith.constant 0 : i32
    %c0_i32_0 = arith.constant 0 : i32
    %c0_i32_1 = arith.constant 0 : i32
    return %c0_i32, %c0_i32_0 : i32, i32
  }
  func.func @transform_7(%arg0: i32) -> (i32, i32) {
    %c0_i32 = arith.constant 0 : i32
    %c0_i32_0 = arith.constant 0 : i32
    %c0_i32_1 = arith.constant 0 : i32
    return %c0_i32, %c0_i32_0 : i32, i32
  }
  func.func @transform_8(%arg0: i32) -> (i32, i32) {
    %c0_i32 = arith.constant 0 : i32
    %c0_i32_0 = arith.constant 0 : i32
    %c0_i32_1 = arith.constant 0 : i32
    return %c0_i32, %c0_i32_0 : i32, i32
  }
  func.func @transform_9(%arg0: i32) -> (i32, i32) {
    %c0_i32 = arith.constant 0 : i32
    %c0_i32_0 = arith.constant 0 : i32
    %c0_i32_1 = arith.constant 0 : i32
    return %c0_i32, %c0_i32_0 : i32, i32
  }
  func.func @transform_10(%arg0: i32) -> (i32, i32) {
    %c0_i32 = arith.constant 0 : i32
    %c0_i32_0 = arith.constant 0 : i32
    %c0_i32_1 = arith.constant 0 : i32
    return %c0_i32, %c0_i32_0 : i32, i32
  }
  func.func @transform_11(%arg0: i32) -> (i32, i32, i32) {
    %c0_i32 = arith.constant 0 : i32
    %c0_i32_0 = arith.constant 0 : i32
    %c0_i32_1 = arith.constant 0 : i32
    return %arg0, %c0_i32, %c0_i32_0 : i32, i32, i32
  }
}

</mosaic_0001>

<llo_original>
// kernel: tpu_custom_call.1
$region0: #{tpu_custom_call.1}
  #allocation0 [shape = 'u32[]', space=smem, size = 0x4, offset = 0x4, fixed_abs, tag = 'smem constant byte address 0x4 - core index']
  #allocation1 [shape = 'u32[72,128]{1,0:T(1,128)}', space=vmem, size = 0x9000, scoped, tag = 'internal scratch']
  %s0 = inlined_call_operand.vmem [shape: f32[2,8,32], index: 0, kind: input, shape index: {}]
  %s1 = inlined_call_operand.vmem [shape: f32[1,32], index: 1, kind: input, shape index: {}]
  %s2 = inlined_call_operand.vmem [shape: f32[1,32], index: 2, kind: input, shape index: {}]
  %s3 = inlined_call_operand.vmem [shape: bf16[32,96], index: 3, kind: input, shape index: {}]
  %s4 = inlined_call_operand.vmem [shape: bf16[32,32], index: 4, kind: input, shape index: {}]
  %s5 = inlined_call_operand.vmem [shape: f32[1,32], index: 5, kind: input, shape index: {}]
  %s6 = inlined_call_operand.vmem [shape: f32[1,32], index: 6, kind: input, shape index: {}]
  %s7 = inlined_call_operand.vmem [shape: bf16[32,128], index: 7, kind: input, shape index: {}]
  %s8 = inlined_call_operand.vmem [shape: f32[1,128], index: 8, kind: input, shape index: {}]
  %s9 = inlined_call_operand.vmem [shape: bf16[128,32], index: 9, kind: input, shape index: {}]
  %s10 = inlined_call_operand.vmem [shape: f32[1,32], index: 10, kind: input, shape index: {}]
  %s11 = inlined_call_operand.hbm [shape: f32[2,8,32], index: 11, kind: output, shape index: {}]
  %s12 = sld [smem:[#allocation0]]
  $region54: #{tpu_custom_call.1} parent=0
    _
  %s14 = ssub.s32 1, %s12
  %s15 = scalar_select 0, %s14, %s12
  $region1: #{tpu_custom_call.1} parent=0
    #allocation2 [shape = 'u8[8192]{0}', space=vmem, size = 0x2000, scoped, tag = 'output window, operand 0, single buffered']
    #allocation3 [shape = 's32[1]{0}', space=sflag, size = 0x4, scoped, tag = 'scoped memory for tpu_custom_call.1']
    %16 = vsyncpa [#allocation3], 0
    // Predicated region
    $region2: #{tpu_custom_call.1} parent=1 // pred_check
      _
    $region3: #{tpu_custom_call.1} parent=1 // pred_check_branch
      %18 = sbr.rel (0) target = $region5
    $region4: #{tpu_custom_call.1} parent=1 // pred_region
      _
    $region5: #{tpu_custom_call.1} parent=1 // pred_fallthru
      _
    // Predicated region
    $region6: #{tpu_custom_call.1} parent=1 // pred_check
      _
    $region7: #{tpu_custom_call.1} parent=1 // pred_check_branch
      %20 = sbr.rel (0) target = $region9
    $region8: #{tpu_custom_call.1} parent=1 // pred_region
      _
    $region9: #{tpu_custom_call.1} parent=1 // pred_fallthru
      _
    // Predicated region
    $region10: #{tpu_custom_call.1} parent=1 // pred_check
      _
    $region11: #{tpu_custom_call.1} parent=1 // pred_check_branch
      %22 = sbr.rel (0) target = $region13
    $region12: #{tpu_custom_call.1} parent=1 // pred_region
      _
    $region13: #{tpu_custom_call.1} parent=1 // pred_fallthru
      _
    // Predicated region
    $region14: #{tpu_custom_call.1} parent=1 // pred_check
      _
    $region15: #{tpu_custom_call.1} parent=1 // pred_check_branch
      %24 = sbr.rel (0) target = $region17
    $region16: #{tpu_custom_call.1} parent=1 // pred_region
      _
    $region17: #{tpu_custom_call.1} parent=1 // pred_fallthru
      _
    // Predicated region
    $region18: #{tpu_custom_call.1} parent=1 // pred_check
      _
    $region19: #{tpu_custom_call.1} parent=1 // pred_check_branch
      %26 = sbr.rel (0) target = $region21
    $region20: #{tpu_custom_call.1} parent=1 // pred_region
      _
    $region21: #{tpu_custom_call.1} parent=1 // pred_fallthru
      _
    // Predicated region
    $region22: #{tpu_custom_call.1} parent=1 // pred_check
      _
    $region23: #{tpu_custom_call.1} parent=1 // pred_check_branch
      %28 = sbr.rel (0) target = $region25
    $region24: #{tpu_custom_call.1} parent=1 // pred_region
      _
    $region25: #{tpu_custom_call.1} parent=1 // pred_fallthru
      _
    // Predicated region
    $region26: #{tpu_custom_call.1} parent=1 // pred_check
      _
    $region27: #{tpu_custom_call.1} parent=1 // pred_check_branch
      %30 = sbr.rel (0) target = $region29
    $region28: #{tpu_custom_call.1} parent=1 // pred_region
      _
    $region29: #{tpu_custom_call.1} parent=1 // pred_fallthru
      _
    // Predicated region
    $region30: #{tpu_custom_call.1} parent=1 // pred_check
      _
    $region31: #{tpu_custom_call.1} parent=1 // pred_check_branch
      %32 = sbr.rel (0) target = $region33
    $region32: #{tpu_custom_call.1} parent=1 // pred_region
      _
    $region33: #{tpu_custom_call.1} parent=1 // pred_fallthru
      _
    // Predicated region
    $region34: #{tpu_custom_call.1} parent=1 // pred_check
      _
    $region35: #{tpu_custom_call.1} parent=1 // pred_check_branch
      %34 = sbr.rel (0) target = $region37
    $region36: #{tpu_custom_call.1} parent=1 // pred_region
      _
    $region37: #{tpu_custom_call.1} parent=1 // pred_fallthru
      _
    // Predicated region
    $region38: #{tpu_custom_call.1} parent=1 // pred_check
      _
    $region39: #{tpu_custom_call.1} parent=1 // pred_check_branch
      %36 = sbr.rel (0) target = $region41
    $region40: #{tpu_custom_call.1} parent=1 // pred_region
      _
    $region41: #{tpu_custom_call.1} parent=1 // pred_fallthru
      _
    // Predicated region
    $region42: #{tpu_custom_call.1} parent=1 // pred_check
      _
    $region43: #{tpu_custom_call.1} parent=1 // pred_check_branch
      %38 = sbr.rel (0) target = $region45
    $region44: #{tpu_custom_call.1} parent=1 // pred_region
      _
    $region45: #{tpu_custom_call.1} parent=1 // pred_fallthru
      _
    %v40 = vld [vmem:[%s0] sm:$0xff]
    %v41 = vld [vmem:[%s0 + $0x8] sm:$0xff]
    %v42 = vld [vmem:[%s1] sm:$0x1]
    %v43 = vld [vmem:[%s2] sm:$0x1]
    %vm44 = vcmask 261120
    %v45 = vsel %vm44, %v40, 0.0
    %46 = vadd.xlane.f32.xlu0 %v45
    %v47 = vpop.xlane.xlu0 %46
    %v48 = vsel %vm44, %v41, 0.0
    %49 = vadd.xlane.f32.xlu0 %v48
    %v50 = vpop.xlane.xlu0 %49
    %v51 = vrcp.pop 32.0
    %v52 = vmul.f32 32.0, %v51
    %v53 = vsub.f32 1.0, %v52
    %v54 = vmul.f32 %v51, %v53
    %v55 = vadd.f32 %v51, %v54
    %vm56 = vweird.f32 %v51
    %v57 = vsel %vm56, %v51, %v55
    %v58 = vmul.f32 %v47, %v57
    %v59 = vmul.f32 %v50, %v57
    %v60 = vsub.f32 %v40, %v58
    %v61 = vsub.f32 %v41, %v59
    %v62 = vmul.f32 %v60, %v60
    %v63 = vmul.f32 %v61, %v61
    %v64 = vsel %vm44, %v62, 0.0
    %65 = vadd.xlane.f32.xlu0 %v64
    %v66 = vpop.xlane.xlu0 %65
    %v67 = vsel %vm44, %v63, 0.0
    %68 = vadd.xlane.f32.xlu0 %v67
    %v69 = vpop.xlane.xlu0 %68
    %v70 = vmul.f32 %v66, %v57
    %v71 = vmul.f32 %v69, %v57
    %v72 = vadd.f32 %v70, 1e-05
    %v73 = vadd.f32 %v71, 1e-05
    %v74 = vrsqrt.pop %v72
    %v75 = vmul.f32 %v74, %v72
    %v76 = vmul.f32 %v75, %v74
    %v77 = vmul.f32 0.5, %v76
    %v78 = vsub.f32 1.5, %v77
    %v79 = vmul.f32 %v74, %v78
    %vm80 = vweird.f32 %v72
    %vm81 = vweird.f32 %v74
    %vm82 = vmor %vm80, %vm81
    %v83 = vsel %vm82, %v74, %v79
    %v84 = vrsqrt.pop %v73
    %v85 = vmul.f32 %v84, %v73
    %v86 = vmul.f32 %v85, %v84
    %v87 = vmul.f32 0.5, %v86
    %v88 = vsub.f32 1.5, %v87
    %v89 = vmul.f32 %v84, %v88
    %vm90 = vweird.f32 %v73
    %vm91 = vweird.f32 %v84
    %vm92 = vmor %vm90, %vm91
    %v93 = vsel %vm92, %v84, %v89
    %v94 = vmul.f32 %v60, %v83
    %v95 = vmul.f32 %v61, %v93
    %v97 = vperm.slane %v42, 0
    %v99 = vmul.f32 %v94, %v97
    %v100 = vmul.f32 %v95, %v97
    %v102 = vperm.slane %v43, 0
    %v104 = vadd.f32 %v99, %v102
    %v105 = vadd.f32 %v100, %v102
    %v106 = vpack.c.bf16 %v105, %v104
    %v107 = vld [vmem:[%s3] sm:$0xf]
    %v108 = vld [vmem:[%s3 + $0x4] sm:$0xf]
    %v109 = vld [vmem:[%s3 + $0x8] sm:$0xf]
    %v110 = vld [vmem:[%s3 + $0xc] sm:$0xf]
    %v115 = vunpack.c.l.b16 %v107
    %v116 = vunpack.c.l.b16 %v108
    %v117 = vunpack.c.l.b16 %v109
    %v118 = vunpack.c.l.b16 %v110
    %v119 = vpack.c.b16 %v116, %v115
    %v120 = vpack.c.b16 %v118, %v117
    %v124 = vsel %vm44, %v106, 0
    %126 = vmatpush.bf16.msra.mxu0 0
    %127 = vmatpush.bf16.msra.mxu0 0
    %128 = vmatpush.bf16.msra.mxu0 0
    %129 = vmatpush.bf16.msra.mxu0 0
    %130 = vmatpush.bf16.msra.mxu0 0
    %131 = vmatpush.bf16.msra.mxu0 0
    %132 = vmatpush.bf16.msra.mxu0 %v120
    %133 = vmatpush.bf16.msra.mxu0 %v119
    %134 = vmatmul.bf16.gmra.mxu0 %v124
    %v135 = vpop.f32.mrf.mxu0
    %v136 = vadd.f32 0.0, %v135
    %v137 = vpop.f32.mrf.mxu0
    %v138 = vadd.f32 0.0, %v137
    %139 = vdwg.mxu0
    %v140 = vlaneseq
    %v141 = vshrl.u32 %v140, 7
    %v142 = vlaneseq
    %v143 = vand.u32 %v142, 127
    %vm144 = vcmp.le.s32.totalorder %v143, %v141
    %v145 = vmul.f32 %v136, 0.35355338
    %v146 = vmul.f32 %v138, 0.35355338
    %v147 = vpack.c.bf16 %v145, %v145
    %v148 = vpack.c.bf16 %v146, %v146
    %v149 = vpack.c.bf16 %v136, %v136
    %v150 = vpack.c.bf16 %v138, %v138
    %v152 = vunpack.c.l.b16 %v149
    %v153 = vpack.c.b16 %v152, %v152
    %154 = vrot.lane.b32.xlu0 %v153, 96
    %v155 = vpop.permute.xlu0 %154
    %vm156 = vcmask 64512
    %v158 = vsel %vm156, %v147, 0
    %v161 = vsel %vm156, %v155, 0
    %163 = vmatpush.bf16.xpose.msra.mxu0 0
    %164 = vmatpush.bf16.xpose.msra.mxu0 0
    %165 = vmatpush.bf16.xpose.msra.mxu0 0
    %166 = vmatpush.bf16.xpose.msra.mxu0 0
    %167 = vmatpush.bf16.xpose.msra.mxu0 0
    %168 = vmatpush.bf16.xpose.msra.mxu0 0
    %169 = vmatpush.bf16.xpose.msra.mxu0 0
    %170 = vmatpush.bf16.xpose.msra.mxu0 %v161
    %171 = vmatmul.bf16.gmra.mxu0 %v158
    %v172 = vpop.f32.mrf.mxu0
    %v173 = vadd.f32 0.0, %v172
    %v174 = vpop.f32.mrf.mxu0
    %175 = vdwg.mxu0
    %v177 = vunpack.c.l.b16 %v150
    %v178 = vpack.c.b16 %v177, %v177
    %179 = vrot.lane.b32.xlu0 %v178, 96
    %v180 = vpop.permute.xlu0 %179
    %v182 = vsel %vm156, %v148, 0
    %v185 = vsel %vm156, %v180, 0
    %187 = vmatpush.bf16.xpose.msra.mxu0 0
    %188 = vmatpush.bf16.xpose.msra.mxu0 0
    %189 = vmatpush.bf16.xpose.msra.mxu0 0
    %190 = vmatpush.bf16.xpose.msra.mxu0 0
    %191 = vmatpush.bf16.xpose.msra.mxu0 0
    %192 = vmatpush.bf16.xpose.msra.mxu0 0
    %193 = vmatpush.bf16.xpose.msra.mxu0 0
    %194 = vmatpush.bf16.xpose.msra.mxu0 %v185
    %195 = vmatmul.bf16.gmra.mxu0 %v182
    %v196 = vpop.f32.mrf.mxu0
    %v197 = vadd.f32 0.0, %v196
    %v198 = vpop.f32.mrf.mxu0
    %199 = vdwg.mxu0
    %v200 = vsel %vm144, 1, 0
    %vm201 = vcmp.eq.s32.totalorder %v200, 1
    %v202 = vsel %vm201, %v173, -inf
    %v203 = vsel %vm201, %v197, -inf
    %v204 = vsel %vm156, %v202, -inf
    %205 = vmax.xlane.f32.xlu0 %v204
    %v206 = vpop.xlane.xlu0 %205
    %v207 = vsel %vm156, %v203, -inf
    %208 = vmax.xlane.f32.xlu0 %v207
    %v209 = vpop.xlane.xlu0 %208
    %v210 = vsub.f32 %v202, %v206
    %v211 = vsub.f32 %v203, %v209
    %v212 = vmul.f32 %v210, 1.442695
    %v213 = vpow.pop %v212
    %v214 = vmul.f32 %v211, 1.442695
    %v215 = vpow.pop %v214
    %v216 = vsel %vm156, %v213, 0.0
    %217 = vadd.xlane.f32.xlu0 %v216
    %v218 = vpop.xlane.xlu0 %217
    %v219 = vsel %vm156, %v215, 0.0
    %220 = vadd.xlane.f32.xlu0 %v219
    %v221 = vpop.xlane.xlu0 %220
    %v222 = vpack.c.bf16 %v213, %v213
    %v223 = vpack.c.bf16 %v215, %v215
    %224 = vrot.lane.b32.xlu0 %v153, 64
    %v225 = vpop.permute.xlu0 %224
    %v227 = vsel %vm156, %v222, 0
    %vm229 = vcmask 1043456
    %v231 = vsel %vm229, %v225, 0
    %233 = vmatpush.bf16.msra.mxu0 0
    %234 = vmatpush.bf16.msra.mxu0 0
    %235 = vmatpush.bf16.msra.mxu0 0
    %236 = vmatpush.bf16.msra.mxu0 0
    %237 = vmatpush.bf16.msra.mxu0 0
    %238 = vmatpush.bf16.msra.mxu0 0
    %239 = vmatpush.bf16.msra.mxu0 0
    %240 = vmatpush.bf16.msra.mxu0 %v231
    %241 = vmatmul.bf16.gmra.mxu0 %v227
    %v242 = vpop.f32.mrf.mxu0
    %v243 = vadd.f32 0.0, %v242
    %v244 = vpop.f32.mrf.mxu0
    %245 = vdwg.mxu0
    %246 = vrot.lane.b32.xlu0 %v178, 64
    %v247 = vpop.permute.xlu0 %246
    %v249 = vsel %vm156, %v223, 0
    %v252 = vsel %vm229, %v247, 0
    %254 = vmatpush.bf16.msra.mxu0 0
    %255 = vmatpush.bf16.msra.mxu0 0
    %256 = vmatpush.bf16.msra.mxu0 0
    %257 = vmatpush.bf16.msra.mxu0 0
    %258 = vmatpush.bf16.msra.mxu0 0
    %259 = vmatpush.bf16.msra.mxu0 0
    %260 = vmatpush.bf16.msra.mxu0 0
    %261 = vmatpush.bf16.msra.mxu0 %v252
    %262 = vmatmul.bf16.gmra.mxu0 %v249
    %v263 = vpop.f32.mrf.mxu0
    %v264 = vadd.f32 0.0, %v263
    %v265 = vpop.f32.mrf.mxu0
    %266 = vdwg.mxu0
    %v267 = vrcp.pop %v218
    %v268 = vrcp.pop %v221
    %v269 = vmul.f32 %v243, %v267
    %v270 = vmul.f32 %v264, %v268
    %v272 = vunpack.c.l.b16 %v147
    %v273 = vpack.c.b16 %v272, %v272
    %274 = vrot.lane.b32.xlu0 %v273, 120
    %v275 = vpop.permute.xlu0 %274
    %276 = vrot.lane.b32.xlu0 %v153, 88
    %v277 = vpop.permute.xlu0 %276
    %v279 = vsel %vm156, %v275, 0
    %v282 = vsel %vm156, %v277, 0
    %284 = vmatpush.bf16.xpose.msra.mxu0 0
    %285 = vmatpush.bf16.xpose.msra.mxu0 0
    %286 = vmatpush.bf16.xpose.msra.mxu0 0
    %287 = vmatpush.bf16.xpose.msra.mxu0 0
    %288 = vmatpush.bf16.xpose.msra.mxu0 0
    %289 = vmatpush.bf16.xpose.msra.mxu0 0
    %290 = vmatpush.bf16.xpose.msra.mxu0 0
    %291 = vmatpush.bf16.xpose.msra.mxu0 %v282
    %292 = vmatmul.bf16.gmra.mxu0 %v279
    %v293 = vpop.f32.mrf.mxu0
    %v294 = vadd.f32 0.0, %v293
    %v295 = vpop.f32.mrf.mxu0
    %296 = vdwg.mxu0
    %v298 = vunpack.c.l.b16 %v148
    %v299 = vpack.c.b16 %v298, %v298
    %300 = vrot.lane.b32.xlu0 %v299, 120
    %v301 = vpop.permute.xlu0 %300
    %302 = vrot.lane.b32.xlu0 %v178, 88
    %v303 = vpop.permute.xlu0 %302
    %v305 = vsel %vm156, %v301, 0
    %v308 = vsel %vm156, %v303, 0
    %310 = vmatpush.bf16.xpose.msra.mxu0 0
    %311 = vmatpush.bf16.xpose.msra.mxu0 0
    %312 = vmatpush.bf16.xpose.msra.mxu0 0
    %313 = vmatpush.bf16.xpose.msra.mxu0 0
    %314 = vmatpush.bf16.xpose.msra.mxu0 0
    %315 = vmatpush.bf16.xpose.msra.mxu0 0
    %316 = vmatpush.bf16.xpose.msra.mxu0 0
    %317 = vmatpush.bf16.xpose.msra.mxu0 %v308
    %318 = vmatmul.bf16.gmra.mxu0 %v305
    %v319 = vpop.f32.mrf.mxu0
    %v320 = vadd.f32 0.0, %v319
    %v321 = vpop.f32.mrf.mxu0
    %322 = vdwg.mxu0
    %v323 = vsel %vm201, %v294, -inf
    %v324 = vsel %vm201, %v320, -inf
    %v325 = vsel %vm156, %v323, -inf
    %326 = vmax.xlane.f32.xlu0 %v325
    %v327 = vpop.xlane.xlu0 %326
    %v328 = vsel %vm156, %v324, -inf
    %329 = vmax.xlane.f32.xlu0 %v328
    %v330 = vpop.xlane.xlu0 %329
    %v331 = vsub.f32 %v323, %v327
    %v332 = vsub.f32 %v324, %v330
    %v333 = vmul.f32 %v331, 1.442695
    %v334 = vpow.pop %v333
    %v335 = vmul.f32 %v332, 1.442695
    %v336 = vpow.pop %v335
    %v337 = vsel %vm156, %v334, 0.0
    %338 = vadd.xlane.f32.xlu0 %v337
    %v339 = vpop.xlane.xlu0 %338
    %v340 = vsel %vm156, %v336, 0.0
    %341 = vadd.xlane.f32.xlu0 %v340
    %v342 = vpop.xlane.xlu0 %341
    %v343 = vpack.c.bf16 %v334, %v334
    %v344 = vpack.c.bf16 %v336, %v336
    %345 = vrot.lane.b32.xlu0 %v153, 56
    %v346 = vpop.permute.xlu0 %345
    %v348 = vsel %vm156, %v343, 0
    %v351 = vsel %vm229, %v346, 0
    %353 = vmatpush.bf16.msra.mxu0 0
    %354 = vmatpush.bf16.msra.mxu0 0
    %355 = vmatpush.bf16.msra.mxu0 0
    %356 = vmatpush.bf16.msra.mxu0 0
    %357 = vmatpush.bf16.msra.mxu0 0
    %358 = vmatpush.bf16.msra.mxu0 0
    %359 = vmatpush.bf16.msra.mxu0 0
    %360 = vmatpush.bf16.msra.mxu0 %v351
    %361 = vmatmul.bf16.gmra.mxu0 %v348
    %v362 = vpop.f32.mrf.mxu0
    %v363 = vadd.f32 0.0, %v362
    %v364 = vpop.f32.mrf.mxu0
    %365 = vdwg.mxu0
    %366 = vrot.lane.b32.xlu0 %v178, 56
    %v367 = vpop.permute.xlu0 %366
    %v369 = vsel %vm156, %v344, 0
    %v372 = vsel %vm229, %v367, 0
    %374 = vmatpush.bf16.msra.mxu0 0
    %375 = vmatpush.bf16.msra.mxu0 0
    %376 = vmatpush.bf16.msra.mxu0 0
    %377 = vmatpush.bf16.msra.mxu0 0
    %378 = vmatpush.bf16.msra.mxu0 0
    %379 = vmatpush.bf16.msra.mxu0 0
    %380 = vmatpush.bf16.msra.mxu0 0
    %381 = vmatpush.bf16.msra.mxu0 %v372
    %382 = vmatmul.bf16.gmra.mxu0 %v369
    %v383 = vpop.f32.mrf.mxu0
    %v384 = vadd.f32 0.0, %v383
    %v385 = vpop.f32.mrf.mxu0
    %386 = vdwg.mxu0
    %v387 = vrcp.pop %v339
    %v388 = vrcp.pop %v342
    %v389 = vmul.f32 %v363, %v387
    %v390 = vmul.f32 %v384, %v388
    %391 = vrot.lane.b32.xlu0 %v273, 112
    %v392 = vpop.permute.xlu0 %391
    %393 = vrot.lane.b32.xlu0 %v153, 80
    %v394 = vpop.permute.xlu0 %393
    %v396 = vsel %vm156, %v392, 0
    %v399 = vsel %vm156, %v394, 0
    %401 = vmatpush.bf16.xpose.msra.mxu0 0
    %402 = vmatpush.bf16.xpose.msra.mxu0 0
    %403 = vmatpush.bf16.xpose.msra.mxu0 0
    %404 = vmatpush.bf16.xpose.msra.mxu0 0
    %405 = vmatpush.bf16.xpose.msra.mxu0 0
    %406 = vmatpush.bf16.xpose.msra.mxu0 0
    %407 = vmatpush.bf16.xpose.msra.mxu0 0
    %408 = vmatpush.bf16.xpose.msra.mxu0 %v399
    %409 = vmatmul.bf16.gmra.mxu0 %v396
    %v410 = vpop.f32.mrf.mxu0
    %v411 = vadd.f32 0.0, %v410
    %v412 = vpop.f32.mrf.mxu0
    %413 = vdwg.mxu0
    %414 = vrot.lane.b32.xlu0 %v299, 112
    %v415 = vpop.permute.xlu0 %414
    %416 = vrot.lane.b32.xlu0 %v178, 80
    %v417 = vpop.permute.xlu0 %416
    %v419 = vsel %vm156, %v415, 0
    %v422 = vsel %vm156, %v417, 0
    %424 = vmatpush.bf16.xpose.msra.mxu0 0
    %425 = vmatpush.bf16.xpose.msra.mxu0 0
    %426 = vmatpush.bf16.xpose.msra.mxu0 0
    %427 = vmatpush.bf16.xpose.msra.mxu0 0
    %428 = vmatpush.bf16.xpose.msra.mxu0 0
    %429 = vmatpush.bf16.xpose.msra.mxu0 0
    %430 = vmatpush.bf16.xpose.msra.mxu0 0
    %431 = vmatpush.bf16.xpose.msra.mxu0 %v422
    %432 = vmatmul.bf16.gmra.mxu0 %v419
    %v433 = vpop.f32.mrf.mxu0
    %v434 = vadd.f32 0.0, %v433
    %v435 = vpop.f32.mrf.mxu0
    %436 = vdwg.mxu0
    %v437 = vsel %vm201, %v411, -inf
    %v438 = vsel %vm201, %v434, -inf
    %v439 = vsel %vm156, %v437, -inf
    %440 = vmax.xlane.f32.xlu0 %v439
    %v441 = vpop.xlane.xlu0 %440
    %v442 = vsel %vm156, %v438, -inf
    %443 = vmax.xlane.f32.xlu0 %v442
    %v444 = vpop.xlane.xlu0 %443
    %v445 = vsub.f32 %v437, %v441
    %v446 = vsub.f32 %v438, %v444
    %v447 = vmul.f32 %v445, 1.442695
    %v448 = vpow.pop %v447
    %v449 = vmul.f32 %v446, 1.442695
    %v450 = vpow.pop %v449
    %v451 = vsel %vm156, %v448, 0.0
    %452 = vadd.xlane.f32.xlu0 %v451
    %v453 = vpop.xlane.xlu0 %452
    %v454 = vsel %vm156, %v450, 0.0
    %455 = vadd.xlane.f32.xlu0 %v454
    %v456 = vpop.xlane.xlu0 %455
    %v457 = vpack.c.bf16 %v448, %v448
    %v458 = vpack.c.bf16 %v450, %v450
    %459 = vrot.lane.b32.xlu0 %v153, 48
    %v460 = vpop.permute.xlu0 %459
    %v462 = vsel %vm156, %v457, 0
    %v465 = vsel %vm229, %v460, 0
    %467 = vmatpush.bf16.msra.mxu0 0
    %468 = vmatpush.bf16.msra.mxu0 0
    %469 = vmatpush.bf16.msra.mxu0 0
    %470 = vmatpush.bf16.msra.mxu0 0
    %471 = vmatpush.bf16.msra.mxu0 0
    %472 = vmatpush.bf16.msra.mxu0 0
    %473 = vmatpush.bf16.msra.mxu0 0
    %474 = vmatpush.bf16.msra.mxu0 %v465
    %475 = vmatmul.bf16.gmra.mxu0 %v462
    %v476 = vpop.f32.mrf.mxu0
    %v477 = vadd.f32 0.0, %v476
    %v478 = vpop.f32.mrf.mxu0
    %479 = vdwg.mxu0
    %480 = vrot.lane.b32.xlu0 %v178, 48
    %v481 = vpop.permute.xlu0 %480
    %v483 = vsel %vm156, %v458, 0
    %v486 = vsel %vm229, %v481, 0
    %488 = vmatpush.bf16.msra.mxu0 0
    %489 = vmatpush.bf16.msra.mxu0 0
    %490 = vmatpush.bf16.msra.mxu0 0
    %491 = vmatpush.bf16.msra.mxu0 0
    %492 = vmatpush.bf16.msra.mxu0 0
    %493 = vmatpush.bf16.msra.mxu0 0
    %494 = vmatpush.bf16.msra.mxu0 0
    %495 = vmatpush.bf16.msra.mxu0 %v486
    %496 = vmatmul.bf16.gmra.mxu0 %v483
    %v497 = vpop.f32.mrf.mxu0
    %v498 = vadd.f32 0.0, %v497
    %v499 = vpop.f32.mrf.mxu0
    %500 = vdwg.mxu0
    %v501 = vrcp.pop %v453
    %v502 = vrcp.pop %v456
    %v503 = vmul.f32 %v477, %v501
    %v504 = vmul.f32 %v498, %v502
    %505 = vrot.lane.b32.xlu0 %v273, 104
    %v506 = vpop.permute.xlu0 %505
    %507 = vrot.lane.b32.xlu0 %v153, 72
    %v508 = vpop.permute.xlu0 %507
    %v510 = vsel %vm156, %v506, 0
    %v513 = vsel %vm156, %v508, 0
    %515 = vmatpush.bf16.xpose.msra.mxu0 0
    %516 = vmatpush.bf16.xpose.msra.mxu0 0
    %517 = vmatpush.bf16.xpose.msra.mxu0 0
    %518 = vmatpush.bf16.xpose.msra.mxu0 0
    %519 = vmatpush.bf16.xpose.msra.mxu0 0
    %520 = vmatpush.bf16.xpose.msra.mxu0 0
    %521 = vmatpush.bf16.xpose.msra.mxu0 0
    %522 = vmatpush.bf16.xpose.msra.mxu0 %v513
    %523 = vmatmul.bf16.gmra.mxu0 %v510
    %v524 = vpop.f32.mrf.mxu0
    %v525 = vadd.f32 0.0, %v524
    %v526 = vpop.f32.mrf.mxu0
    %527 = vdwg.mxu0
    %528 = vrot.lane.b32.xlu0 %v299, 104
    %v529 = vpop.permute.xlu0 %528
    %530 = vrot.lane.b32.xlu0 %v178, 72
    %v531 = vpop.permute.xlu0 %530
    %v533 = vsel %vm156, %v529, 0
    %v536 = vsel %vm156, %v531, 0
    %538 = vmatpush.bf16.xpose.msra.mxu0 0
    %539 = vmatpush.bf16.xpose.msra.mxu0 0
    %540 = vmatpush.bf16.xpose.msra.mxu0 0
    %541 = vmatpush.bf16.xpose.msra.mxu0 0
    %542 = vmatpush.bf16.xpose.msra.mxu0 0
    %543 = vmatpush.bf16.xpose.msra.mxu0 0
    %544 = vmatpush.bf16.xpose.msra.mxu0 0
    %545 = vmatpush.bf16.xpose.msra.mxu0 %v536
    %546 = vmatmul.bf16.gmra.mxu0 %v533
    %v547 = vpop.f32.mrf.mxu0
    %v548 = vadd.f32 0.0, %v547
    %v549 = vpop.f32.mrf.mxu0
    %550 = vdwg.mxu0
    %v551 = vsel %vm201, %v525, -inf
    %v552 = vsel %vm201, %v548, -inf
    %v553 = vsel %vm156, %v551, -inf
    %554 = vmax.xlane.f32.xlu0 %v553
    %v555 = vpop.xlane.xlu0 %554
    %v556 = vsel %vm156, %v552, -inf
    %557 = vmax.xlane.f32.xlu0 %v556
    %v558 = vpop.xlane.xlu0 %557
    %v559 = vsub.f32 %v551, %v555
    %v560 = vsub.f32 %v552, %v558
    %v561 = vmul.f32 %v559, 1.442695
    %v562 = vpow.pop %v561
    %v563 = vmul.f32 %v560, 1.442695
    %v564 = vpow.pop %v563
    %v565 = vsel %vm156, %v562, 0.0
    %566 = vadd.xlane.f32.xlu0 %v565
    %v567 = vpop.xlane.xlu0 %566
    %v568 = vsel %vm156, %v564, 0.0
    %569 = vadd.xlane.f32.xlu0 %v568
    %v570 = vpop.xlane.xlu0 %569
    %v571 = vpack.c.bf16 %v562, %v562
    %v572 = vpack.c.bf16 %v564, %v564
    %573 = vrot.lane.b32.xlu0 %v153, 40
    %v574 = vpop.permute.xlu0 %573
    %v576 = vsel %vm156, %v571, 0
    %v579 = vsel %vm229, %v574, 0
    %581 = vmatpush.bf16.msra.mxu0 0
    %582 = vmatpush.bf16.msra.mxu0 0
    %583 = vmatpush.bf16.msra.mxu0 0
    %584 = vmatpush.bf16.msra.mxu0 0
    %585 = vmatpush.bf16.msra.mxu0 0
    %586 = vmatpush.bf16.msra.mxu0 0
    %587 = vmatpush.bf16.msra.mxu0 0
    %588 = vmatpush.bf16.msra.mxu0 %v579
    %589 = vmatmul.bf16.gmra.mxu0 %v576
    %v590 = vpop.f32.mrf.mxu0
    %v591 = vadd.f32 0.0, %v590
    %v592 = vpop.f32.mrf.mxu0
    %593 = vdwg.mxu0
    %594 = vrot.lane.b32.xlu0 %v178, 40
    %v595 = vpop.permute.xlu0 %594
    %v597 = vsel %vm156, %v572, 0
    %v600 = vsel %vm229, %v595, 0
    %602 = vmatpush.bf16.msra.mxu0 0
    %603 = vmatpush.bf16.msra.mxu0 0
    %604 = vmatpush.bf16.msra.mxu0 0
    %605 = vmatpush.bf16.msra.mxu0 0
    %606 = vmatpush.bf16.msra.mxu0 0
    %607 = vmatpush.bf16.msra.mxu0 0
    %608 = vmatpush.bf16.msra.mxu0 0
    %609 = vmatpush.bf16.msra.mxu0 %v600
    %610 = vmatmul.bf16.gmra.mxu0 %v597
    %v611 = vpop.f32.mrf.mxu0
    %v612 = vadd.f32 0.0, %v611
    %v613 = vpop.f32.mrf.mxu0
    %614 = vdwg.mxu0
    %v615 = vrcp.pop %v567
    %v616 = vrcp.pop %v570
    %v617 = vmul.f32 %v591, %v615
    %v618 = vmul.f32 %v612, %v616
    %621 = vrot.lane.b32.xlu0 %v389, 8
    %v622 = vpop.permute.xlu0 %621
    %623 = vrot.lane.b32.xlu0 %v390, 8
    %v624 = vpop.permute.xlu0 %623
    %629 = vrot.lane.b32.xlu0 %v503, 16
    %v630 = vpop.permute.xlu0 %629
    %631 = vrot.lane.b32.xlu0 %v504, 16
    %v632 = vpop.permute.xlu0 %631
    %637 = vrot.lane.b32.xlu0 %v617, 24
    %v638 = vpop.permute.xlu0 %637
    %639 = vrot.lane.b32.xlu0 %v618, 24
    %v640 = vpop.permute.xlu0 %639
    %v643 = vsel %vm156, %v269, %v622
    %v644 = vsel %vm156, %v270, %v624
    %vm645 = vcmask 130048
    %v646 = vsel %vm645, %v643, %v630
    %v647 = vsel %vm645, %v644, %v632
    %vm648 = vcmask 195584
    %v649 = vsel %vm648, %v646, %v638
    %v650 = vsel %vm648, %v647, %v640
    %v651 = vpack.c.bf16 %v650, %v649
    %v652 = vld [vmem:[%s4] sm:$0xf]
    %v653 = vld [vmem:[%s4 + $0x4] sm:$0xf]
    %v654 = vld [vmem:[%s4 + $0x8] sm:$0xf]
    %v655 = vld [vmem:[%s4 + $0xc] sm:$0xf]
    %v660 = vunpack.c.l.b16 %v652
    %v661 = vunpack.c.l.b16 %v653
    %v662 = vunpack.c.l.b16 %v654
    %v663 = vunpack.c.l.b16 %v655
    %v664 = vpack.c.b16 %v661, %v660
    %v665 = vpack.c.b16 %v663, %v662
    %v669 = vsel %vm44, %v651, 0
    %671 = vmatpush.bf16.msra.mxu0 0
    %672 = vmatpush.bf16.msra.mxu0 0
    %673 = vmatpush.bf16.msra.mxu0 0
    %674 = vmatpush.bf16.msra.mxu0 0
    %675 = vmatpush.bf16.msra.mxu0 0
    %676 = vmatpush.bf16.msra.mxu0 0
    %677 = vmatpush.bf16.msra.mxu0 %v665
    %678 = vmatpush.bf16.msra.mxu0 %v664
    %679 = vmatmul.bf16.gmra.mxu0 %v669
    %v680 = vpop.f32.mrf.mxu0
    %v681 = vadd.f32 0.0, %v680
    %v682 = vpop.f32.mrf.mxu0
    %v683 = vadd.f32 0.0, %v682
    %684 = vdwg.mxu0
    %v685 = vadd.f32 %v40, %v681
    %v686 = vadd.f32 %v41, %v683
    %v687 = vld [vmem:[%s5] sm:$0x1]
    %v688 = vld [vmem:[%s6] sm:$0x1]
    %v689 = vsel %vm44, %v685, 0.0
    %690 = vadd.xlane.f32.xlu0 %v689
    %v691 = vpop.xlane.xlu0 %690
    %v692 = vsel %vm44, %v686, 0.0
    %693 = vadd.xlane.f32.xlu0 %v692
    %v694 = vpop.xlane.xlu0 %693
    %v695 = vmul.f32 %v691, %v57
    %v696 = vmul.f32 %v694, %v57
    %v697 = vsub.f32 %v685, %v695
    %v698 = vsub.f32 %v686, %v696
    %v699 = vmul.f32 %v697, %v697
    %v700 = vmul.f32 %v698, %v698
    %v701 = vsel %vm44, %v699, 0.0
    %702 = vadd.xlane.f32.xlu0 %v701
    %v703 = vpop.xlane.xlu0 %702
    %v704 = vsel %vm44, %v700, 0.0
    %705 = vadd.xlane.f32.xlu0 %v704
    %v706 = vpop.xlane.xlu0 %705
    %v707 = vmul.f32 %v703, %v57
    %v708 = vmul.f32 %v706, %v57
    %v709 = vadd.f32 %v707, 1e-05
    %v710 = vadd.f32 %v708, 1e-05
    %v711 = vrsqrt.pop %v709
    %v712 = vmul.f32 %v711, %v709
    %v713 = vmul.f32 %v712, %v711
    %v714 = vmul.f32 0.5, %v713
    %v715 = vsub.f32 1.5, %v714
    %v716 = vmul.f32 %v711, %v715
    %vm717 = vweird.f32 %v709
    %vm718 = vweird.f32 %v711
    %vm719 = vmor %vm717, %vm718
    %v720 = vsel %vm719, %v711, %v716
    %v721 = vrsqrt.pop %v710
    %v722 = vmul.f32 %v721, %v710
    %v723 = vmul.f32 %v722, %v721
    %v724 = vmul.f32 0.5, %v723
    %v725 = vsub.f32 1.5, %v724
    %v726 = vmul.f32 %v721, %v725
    %vm727 = vweird.f32 %v710
    %vm728 = vweird.f32 %v721
    %vm729 = vmor %vm727, %vm728
    %v730 = vsel %vm729, %v721, %v726
    %v731 = vmul.f32 %v697, %v720
    %v732 = vmul.f32 %v698, %v730
    %v734 = vperm.slane %v687, 0
    %v736 = vmul.f32 %v731, %v734
    %v737 = vmul.f32 %v732, %v734
    %v739 = vperm.slane %v688, 0
    %v741 = vadd.f32 %v736, %v739
    %v742 = vadd.f32 %v737, %v739
    %v743 = vpack.c.bf16 %v742, %v741
    %v744 = vld [vmem:[%s7] sm:$0xf]
    %v745 = vld [vmem:[%s7 + $0x4] sm:$0xf]
    %v746 = vld [vmem:[%s7 + $0x8] sm:$0xf]
    %v747 = vld [vmem:[%s7 + $0xc] sm:$0xf]
    %v748 = vld [vmem:[%s8] sm:$0x1]
    %v750 = vperm.slane %v748, 0
    %v756 = vunpack.c.l.b16 %v744
    %v757 = vunpack.c.l.b16 %v745
    %v758 = vunpack.c.l.b16 %v746
    %v759 = vunpack.c.l.b16 %v747
    %v760 = vpack.c.b16 %v757, %v756
    %v761 = vpack.c.b16 %v759, %v758
    %v765 = vsel %vm44, %v743, 0
    %767 = vmatpush.bf16.msra.mxu0 0
    %768 = vmatpush.bf16.msra.mxu0 0
    %769 = vmatpush.bf16.msra.mxu0 0
    %770 = vmatpush.bf16.msra.mxu0 0
    %771 = vmatpush.bf16.msra.mxu0 0
    %772 = vmatpush.bf16.msra.mxu0 0
    %773 = vmatpush.bf16.msra.mxu0 %v761
    %774 = vmatpush.bf16.msra.mxu0 %v760
    %775 = vmatmul.bf16.gmra.mxu0 %v765
    %v776 = vpop.f32.mrf.mxu0
    %v777 = vadd.f32 %v750, %v776
    %v778 = vpop.f32.mrf.mxu0
    %v779 = vadd.f32 %v750, %v778
    %780 = vdwg.mxu0
    %v781 = vmul.f32 %v777, 0.5
    %v782 = vmul.f32 %v779, 0.5
    %v783 = vmul.f32 %v777, 0.70710677
    %v784 = vmul.f32 %v779, 0.70710677
    %v785 = vand.u32 2147483647, %v783
    %v786 = vand.u32 2147483647, %v784
    %v787 = vmul.f32 %v785, 0.3275911
    %v788 = vmul.f32 %v786, 0.3275911
    %v789 = vadd.f32 %v787, 1.0
    %v790 = vadd.f32 %v788, 1.0
    %v791 = vrcp.pop %v789
    %v792 = vrcp.pop %v790
    %v793 = vmul.f32 %v791, 1.0614054
    %v794 = vmul.f32 %v792, 1.0614054
    %v795 = vadd.f32 %v793, -1.4531521
    %v796 = vadd.f32 %v794, -1.4531521
    %v797 = vmul.f32 %v795, %v791
    %v798 = vmul.f32 %v796, %v792
    %v799 = vadd.f32 %v797, 1.4214138
    %v800 = vadd.f32 %v798, 1.4214138
    %v801 = vmul.f32 %v799, %v791
    %v802 = vmul.f32 %v800, %v792
    %v803 = vadd.f32 %v801, -0.28449672
    %v804 = vadd.f32 %v802, -0.28449672
    %v805 = vmul.f32 %v803, %v791
    %v806 = vmul.f32 %v804, %v792
    %v807 = vadd.f32 %v805, 0.2548296
    %v808 = vadd.f32 %v806, 0.2548296
    %v809 = vmul.f32 %v807, %v791
    %v810 = vmul.f32 %v808, %v792
    %v811 = vsub.f32 0.0, %v785
    %v812 = vsub.f32 0.0, %v786
    %v813 = vmul.f32 %v811, %v785
    %v814 = vmul.f32 %v812, %v786
    %v815 = vmul.f32 %v813, 1.442695
    %v816 = vpow.pop %v815
    %v817 = vmul.f32 %v814, 1.442695
    %v818 = vpow.pop %v817
    %v819 = vmul.f32 %v809, %v816
    %v820 = vmul.f32 %v810, %v818
    %v821 = vsub.f32 1.0, %v819
    %v822 = vsub.f32 1.0, %v820
    %vm823 = vcmp.ge.f32.partialorder %v783, 0.0
    %vm824 = vcmp.ge.f32.partialorder %v784, 0.0
    %v825 = vsub.f32 0.0, %v821
    %v826 = vsub.f32 0.0, %v822
    %v827 = vsel %vm823, %v821, %v825
    %v828 = vsel %vm824, %v822, %v826
    %v829 = vadd.f32 %v827, 1.0
    %v830 = vadd.f32 %v828, 1.0
    %v831 = vmul.f32 %v781, %v829
    %v832 = vmul.f32 %v782, %v830
    %v833 = vpack.c.bf16 %v832, %v831
    %v834 = vld [vmem:[%s9] sm:$0xf]
    %v835 = vld [vmem:[%s9 + $0x4] sm:$0xf]
    %v836 = vld [vmem:[%s9 + $0x8] sm:$0xf]
    %v837 = vld [vmem:[%s9 + $0xc] sm:$0xf]
    %v838 = vld [vmem:[%s9 + $0x10] sm:$0xf]
    %v839 = vld [vmem:[%s9 + $0x14] sm:$0xf]
    %v840 = vld [vmem:[%s9 + $0x18] sm:$0xf]
    %v841 = vld [vmem:[%s9 + $0x1c] sm:$0xf]
    %v842 = vld [vmem:[%s9 + $0x20] sm:$0xf]
    %v843 = vld [vmem:[%s9 + $0x24] sm:$0xf]
    %v844 = vld [vmem:[%s9 + $0x28] sm:$0xf]
    %v845 = vld [vmem:[%s9 + $0x2c] sm:$0xf]
    %v846 = vld [vmem:[%s9 + $0x30] sm:$0xf]
    %v847 = vld [vmem:[%s9 + $0x34] sm:$0xf]
    %v848 = vld [vmem:[%s9 + $0x38] sm:$0xf]
    %v849 = vld [vmem:[%s9 + $0x3c] sm:$0xf]
    %v850 = vld [vmem:[%s10] sm:$0x1]
    %v852 = vperm.slane %v850, 0
    %v870 = vunpack.c.l.b16 %v834
    %v871 = vunpack.c.l.b16 %v835
    %v872 = vunpack.c.l.b16 %v836
    %v873 = vunpack.c.l.b16 %v837
    %v874 = vunpack.c.l.b16 %v838
    %v875 = vunpack.c.l.b16 %v839
    %v876 = vunpack.c.l.b16 %v840
    %v877 = vunpack.c.l.b16 %v841
    %v878 = vunpack.c.l.b16 %v842
    %v879 = vunpack.c.l.b16 %v843
    %v880 = vunpack.c.l.b16 %v844
    %v881 = vunpack.c.l.b16 %v845
    %v882 = vunpack.c.l.b16 %v846
    %v883 = vunpack.c.l.b16 %v847
    %v884 = vunpack.c.l.b16 %v848
    %v885 = vunpack.c.l.b16 %v849
    %v886 = vpack.c.b16 %v871, %v870
    %v887 = vpack.c.b16 %v873, %v872
    %v888 = vpack.c.b16 %v875, %v874
    %v889 = vpack.c.b16 %v877, %v876
    %v890 = vpack.c.b16 %v879, %v878
    %v891 = vpack.c.b16 %v881, %v880
    %v892 = vpack.c.b16 %v883, %v882
    %v893 = vpack.c.b16 %v885, %v884
    %902 = vmatpush.bf16.msra.mxu0 %v893
    %903 = vmatpush.bf16.msra.mxu0 %v892
    %904 = vmatpush.bf16.msra.mxu0 %v891
    %905 = vmatpush.bf16.msra.mxu0 %v890
    %906 = vmatpush.bf16.msra.mxu0 %v889
    %907 = vmatpush.bf16.msra.mxu0 %v888
    %908 = vmatpush.bf16.msra.mxu0 %v887
    %909 = vmatpush.bf16.msra.mxu0 %v886
    %910 = vmatmul.bf16.gmra.mxu0 %v833
    %v911 = vpop.f32.mrf.mxu0
    %v912 = vadd.f32 %v852, %v911
    %v913 = vpop.f32.mrf.mxu0
    %v914 = vadd.f32 %v852, %v913
    %915 = vdwg.mxu0
    %v916 = vadd.f32 %v685, %v912
    %v917 = vadd.f32 %v686, %v914
    %918 = vst.msk [vmem:[#allocation2] sm:$0xff] %vm44, %v916
    %919 = vst.msk [vmem:[#allocation2 + $0x8] sm:$0xff] %vm44, %v917
    // Predicated region
    $region46: #{tpu_custom_call.1} parent=1 // pred_check
      _
    $region47: #{tpu_custom_call.1} parent=1 // pred_check_branch
      %921 = sbr.rel (0) target = $region49
    $region48: #{tpu_custom_call.1} parent=1 // pred_region
      %923 = vsyncadd [#allocation3], 0
      %s924 = sshll.u32 [#allocation2], 4
      %s925 = int_to_ptr.vmem [resolvable:$true] %s924
      %s926 = sshll.u32 %s11, 4
      %s927 = int_to_ptr.hbm [resolvable:$true] %s926
      %932 = dma.vmem_to_hbm [thread:$0]  %s925, 256, %s927, [#allocation3], 128, 128, 8
    $region49: #{tpu_custom_call.1} parent=1 // pred_fallthru
      _
    // Predicated region
    $region50: #{tpu_custom_call.1} parent=1 // pred_check
      _
    $region51: #{tpu_custom_call.1} parent=1 // pred_check_branch
      %934 = sbr.rel (0) target = $region53
    $region52: #{tpu_custom_call.1} parent=1 // pred_region
      %936 = dma.done [#allocation3], 256
    $region53: #{tpu_custom_call.1} parent=1 // pred_fallthru
      _
    %937 = vsyncpa [#allocation3], 1

// kernel: tpu_custom_call.1
$region0: #{tpu_custom_call.1}
  #allocation0 [shape = 'u32[]', space=smem, size = 0x4, offset = 0x4, fixed_abs, tag = 'smem constant byte address 0x4 - core index']
  #allocation1 [shape = 'u32[72,128]{1,0:T(1,128)}', space=vmem, size = 0x9000, scoped, tag = 'internal scratch']
  %s0 = inlined_call_operand.vmem [shape: f32[2,8,32], index: 0, kind: input, shape index: {}]
  %s1 = inlined_call_operand.vmem [shape: f32[1,32], index: 1, kind: input, shape index: {}]
  %s2 = inlined_call_operand.vmem [shape: f32[1,32], index: 2, kind: input, shape index: {}]
  %s3 = inlined_call_operand.vmem [shape: bf16[32,96], index: 3, kind: input, shape index: {}]
  %s4 = inlined_call_operand.vmem [shape: bf16[32,32], index: 4, kind: input, shape index: {}]
  %s5 = inlined_call_operand.vmem [shape: f32[1,32], index: 5, kind: input, shape index: {}]
  %s6 = inlined_call_operand.vmem [shape: f32[1,32], index: 6, kind: input, shape index: {}]
  %s7 = inlined_call_operand.vmem [shape: bf16[32,128], index: 7, kind: input, shape index: {}]
  %s8 = inlined_call_operand.vmem [shape: f32[1,128], index: 8, kind: input, shape index: {}]
  %s9 = inlined_call_operand.vmem [shape: bf16[128,32], index: 9, kind: input, shape index: {}]
  %s10 = inlined_call_operand.vmem [shape: f32[1,32], index: 10, kind: input, shape index: {}]
  %s11 = inlined_call_operand.hbm [shape: f32[2,8,32], index: 11, kind: output, shape index: {}]
  %s12 = sld [smem:[#allocation0]]
  $region54: #{tpu_custom_call.1} parent=0
    _
  %s14 = ssub.s32 1, %s12
  %s15 = scalar_select 0, %s14, %s12
  $region1: #{tpu_custom_call.1} parent=0
    #allocation2 [shape = 'u8[8192]{0}', space=vmem, size = 0x2000, scoped, tag = 'output window, operand 0, single buffered']
    #allocation3 [shape = 's32[1]{0}', space=sflag, size = 0x4, scoped, tag = 'scoped memory for tpu_custom_call.1']
    %16 = vsyncpa [#allocation3], 0
    // Predicated region
    $region2: #{tpu_custom_call.1} parent=1 // pred_check
      _
    $region3: #{tpu_custom_call.1} parent=1 // pred_check_branch
      %18 = sbr.rel (0) target = $region5
    $region4: #{tpu_custom_call.1} parent=1 // pred_region
      _
    $region5: #{tpu_custom_call.1} parent=1 // pred_fallthru
      _
    // Predicated region
    $region6: #{tpu_custom_call.1} parent=1 // pred_check
      _
    $region7: #{tpu_custom_call.1} parent=1 // pred_check_branch
      %20 = sbr.rel (0) target = $region9
    $region8: #{tpu_custom_call.1} parent=1 // pred_region
      _
    $region9: #{tpu_custom_call.1} parent=1 // pred_fallthru
      _
    // Predicated region
    $region10: #{tpu_custom_call.1} parent=1 // pred_check
      _
    $region11: #{tpu_custom_call.1} parent=1 // pred_check_branch
      %22 = sbr.rel (0) target = $region13
    $region12: #{tpu_custom_call.1} parent=1 // pred_region
      _
    $region13: #{tpu_custom_call.1} parent=1 // pred_fallthru
      _
    // Predicated region
    $region14: #{tpu_custom_call.1} parent=1 // pred_check
      _
    $region15: #{tpu_custom_call.1} parent=1 // pred_check_branch
      %24 = sbr.rel (0) target = $region17
    $region16: #{tpu_custom_call.1} parent=1 // pred_region
      _
    $region17: #{tpu_custom_call.1} parent=1 // pred_fallthru
      _
    // Predicated region
    $region18: #{tpu_custom_call.1} parent=1 // pred_check
      _
    $region19: #{tpu_custom_call.1} parent=1 // pred_check_branch
      %26 = sbr.rel (0) target = $region21
    $region20: #{tpu_custom_call.1} parent=1 // pred_region
      _
    $region21: #{tpu_custom_call.1} parent=1 // pred_fallthru
      _
    // Predicated region
    $region22: #{tpu_custom_call.1} parent=1 // pred_check
      _
    $region23: #{tpu_custom_call.1} parent=1 // pred_check_branch
      %28 = sbr.rel (0) target = $region25
    $region24: #{tpu_custom_call.1} parent=1 // pred_region
      _
    $region25: #{tpu_custom_call.1} parent=1 // pred_fallthru
      _
    // Predicated region
    $region26: #{tpu_custom_call.1} parent=1 // pred_check
      _
    $region27: #{tpu_custom_call.1} parent=1 // pred_check_branch
      %30 = sbr.rel (0) target = $region29
    $region28: #{tpu_custom_call.1} parent=1 // pred_region
      _
    $region29: #{tpu_custom_call.1} parent=1 // pred_fallthru
      _
    // Predicated region
    $region30: #{tpu_custom_call.1} parent=1 // pred_check
      _
    $region31: #{tpu_custom_call.1} parent=1 // pred_check_branch
      %32 = sbr.rel (0) target = $region33
    $region32: #{tpu_custom_call.1} parent=1 // pred_region
      _
    $region33: #{tpu_custom_call.1} parent=1 // pred_fallthru
      _
    // Predicated region
    $region34: #{tpu_custom_call.1} parent=1 // pred_check
      _
    $region35: #{tpu_custom_call.1} parent=1 // pred_check_branch
      %34 = sbr.rel (0) target = $region37
    $region36: #{tpu_custom_call.1} parent=1 // pred_region
      _
    $region37: #{tpu_custom_call.1} parent=1 // pred_fallthru
      _
    // Predicated region
    $region38: #{tpu_custom_call.1} parent=1 // pred_check
      _
    $region39: #{tpu_custom_call.1} parent=1 // pred_check_branch
      %36 = sbr.rel (0) target = $region41
    $region40: #{tpu_custom_call.1} parent=1 // pred_region
      _
    $region41: #{tpu_custom_call.1} parent=1 // pred_fallthru
      _
    // Predicated region
    $region42: #{tpu_custom_call.1} parent=1 // pred_check
      _
    $region43: #{tpu_custom_call.1} parent=1 // pred_check_branch
      %38 = sbr.rel (0) target = $region45
    $region44: #{tpu_custom_call.1} parent=1 // pred_region
      _
    $region45: #{tpu_custom_call.1} parent=1 // pred_fallthru
      _
    %v40 = vld [vmem:[%s0] sm:$0xff]
    %v41 = vld [vmem:[%s0 + $0x8] sm:$0xff]
    %v42 = vld [vmem:[%s1] sm:$0x1]
    %v43 = vld [vmem:[%s2] sm:$0x1]
    %vm44 = vcmask 261120
    %v45 = vsel %vm44, %v40, 0.0
    %46 = vadd.xlane.f32.xlu0 %v45
    %v47 = vpop.xlane.xlu0 %46
    %v48 = vsel %vm44, %v41, 0.0
    %49 = vadd.xlane.f32.xlu0 %v48
    %v50 = vpop.xlane.xlu0 %49
    %v51 = vrcp.pop 32.0
    %v52 = vmul.f32 32.0, %v51
    %v53 = vsub.f32 1.0, %v52
    %v54 = vmul.f32 %v51, %v53
    %v55 = vadd.f32 %v51, %v54
    %vm56 = vweird.f32 %v51
    %v57 = vsel %vm56, %v51, %v55
    %v58 = vmul.f32 %v47, %v57
    %v59 = vmul.f32 %v50, %v57
    %v60 = vsub.f32 %v40, %v58
    %v61 = vsub.f32 %v41, %v59
    %v62 = vmul.f32 %v60, %v60
    %v63 = vmul.f32 %v61, %v61
    %v64 = vsel %vm44, %v62, 0.0
    %65 = vadd.xlane.f32.xlu0 %v64
    %v66 = vpop.xlane.xlu0 %65
    %v67 = vsel %vm44, %v63, 0.0
    %68 = vadd.xlane.f32.xlu0 %v67
    %v69 = vpop.xlane.xlu0 %68
    %v70 = vmul.f32 %v66, %v57
    %v71 = vmul.f32 %v69, %v57
    %v72 = vadd.f32 %v70, 1e-05
    %v73 = vadd.f32 %v71, 1e-05
    %v74 = vrsqrt.pop %v72
    %v75 = vmul.f32 %v74, %v72
    %v76 = vmul.f32 %v75, %v74
    %v77 = vmul.f32 0.5, %v76
    %v78 = vsub.f32 1.5, %v77
    %v79 = vmul.f32 %v74, %v78
    %vm80 = vweird.f32 %v72
    %vm81 = vweird.f32 %v74
    %vm82 = vmor %vm80, %vm81
    %v83 = vsel %vm82, %v74, %v79
    %v84 = vrsqrt.pop %v73
    %v85 = vmul.f32 %v84, %v73
    %v86 = vmul.f32 %v85, %v84
    %v87 = vmul.f32 0.5, %v86
    %v88 = vsub.f32 1.5, %v87
    %v89 = vmul.f32 %v84, %v88
    %vm90 = vweird.f32 %v73
    %vm91 = vweird.f32 %v84
    %vm92 = vmor %vm90, %vm91
    %v93 = vsel %vm92, %v84, %v89
    %v94 = vmul.f32 %v60, %v83
    %v95 = vmul.f32 %v61, %v93
    %v97 = vperm.slane %v42, 0
    %v99 = vmul.f32 %v94, %v97
    %v100 = vmul.f32 %v95, %v97
    %v102 = vperm.slane %v43, 0
    %v104 = vadd.f32 %v99, %v102
    %v105 = vadd.f32 %v100, %v102
    %v106 = vpack.c.bf16 %v105, %v104
    %v107 = vld [vmem:[%s3] sm:$0xf]
    %v108 = vld [vmem:[%s3 + $0x4] sm:$0xf]
    %v109 = vld [vmem:[%s3 + $0x8] sm:$0xf]
    %v110 = vld [vmem:[%s3 + $0xc] sm:$0xf]
    %v115 = vunpack.c.l.b16 %v107
    %v116 = vunpack.c.l.b16 %v108
    %v117 = vunpack.c.l.b16 %v109
    %v118 = vunpack.c.l.b16 %v110
    %v119 = vpack.c.b16 %v116, %v115
    %v120 = vpack.c.b16 %v118, %v117
    %v124 = vsel %vm44, %v106, 0
    %126 = vmatpush.bf16.msra.mxu0 0
    %127 = vmatpush.bf16.msra.mxu0 0
    %128 = vmatpush.bf16.msra.mxu0 0
    %129 = vmatpush.bf16.msra.mxu0 0
    %130 = vmatpush.bf16.msra.mxu0 0
    %131 = vmatpush.bf16.msra.mxu0 0
    %132 = vmatpush.bf16.msra.mxu0 %v120
    %133 = vmatpush.bf16.msra.mxu0 %v119
    %134 = vmatmul.bf16.gmra.mxu0 %v124
    %v135 = vpop.f32.mrf.mxu0
    %v136 = vadd.f32 0.0, %v135
    %v137 = vpop.f32.mrf.mxu0
    %v138 = vadd.f32 0.0, %v137
    %139 = vdwg.mxu0
    %v140 = vlaneseq
    %v141 = vshrl.u32 %v140, 7
    %v142 = vlaneseq
    %v143 = vand.u32 %v142, 127
    %vm144 = vcmp.le.s32.totalorder %v143, %v141
    %v145 = vmul.f32 %v136, 0.35355338
    %v146 = vmul.f32 %v138, 0.35355338
    %v147 = vpack.c.bf16 %v145, %v145
    %v148 = vpack.c.bf16 %v146, %v146
    %v149 = vpack.c.bf16 %v136, %v136
    %v150 = vpack.c.bf16 %v138, %v138
    %v152 = vunpack.c.l.b16 %v149
    %v153 = vpack.c.b16 %v152, %v152
    %154 = vrot.lane.b32.xlu0 %v153, 96
    %v155 = vpop.permute.xlu0 %154
    %vm156 = vcmask 64512
    %v158 = vsel %vm156, %v147, 0
    %v161 = vsel %vm156, %v155, 0
    %163 = vmatpush.bf16.xpose.msra.mxu0 0
    %164 = vmatpush.bf16.xpose.msra.mxu0 0
    %165 = vmatpush.bf16.xpose.msra.mxu0 0
    %166 = vmatpush.bf16.xpose.msra.mxu0 0
    %167 = vmatpush.bf16.xpose.msra.mxu0 0
    %168 = vmatpush.bf16.xpose.msra.mxu0 0
    %169 = vmatpush.bf16.xpose.msra.mxu0 0
    %170 = vmatpush.bf16.xpose.msra.mxu0 %v161
    %171 = vmatmul.bf16.gmra.mxu0 %v158
    %v172 = vpop.f32.mrf.mxu0
    %v173 = vadd.f32 0.0, %v172
    %v174 = vpop.f32.mrf.mxu0
    %175 = vdwg.mxu0
    %v177 = vunpack.c.l.b16 %v150
    %v178 = vpack.c.b16 %v177, %v177
    %179 = vrot.lane.b32.xlu0 %v178, 96
    %v180 = vpop.permute.xlu0 %179
    %v182 = vsel %vm156, %v148, 0
    %v185 = vsel %vm156, %v180, 0
    %187 = vmatpush.bf16.xpose.msra.mxu0 0
    %188 = vmatpush.bf16.xpose.msra.mxu0 0
    %189 = vmatpush.bf16.xpose.msra.mxu0 0
    %190 = vmatpush.bf16.xpose.msra.mxu0 0
    %191 = vmatpush.bf16.xpose.msra.mxu0 0
    %192 = vmatpush.bf16.xpose.msra.mxu0 0
    %193 = vmatpush.bf16.xpose.msra.mxu0 0
    %194 = vmatpush.bf16.xpose.msra.mxu0 %v185
    %195 = vmatmul.bf16.gmra.mxu0 %v182
    %v196 = vpop.f32.mrf.mxu0
    %v197 = vadd.f32 0.0, %v196
    %v198 = vpop.f32.mrf.mxu0
    %199 = vdwg.mxu0
    %v200 = vsel %vm144, 1, 0
    %vm201 = vcmp.eq.s32.totalorder %v200, 1
    %v202 = vsel %vm201, %v173, -inf
    %v203 = vsel %vm201, %v197, -inf
    %v204 = vsel %vm156, %v202, -inf
    %205 = vmax.xlane.f32.xlu0 %v204
    %v206 = vpop.xlane.xlu0 %205
    %v207 = vsel %vm156, %v203, -inf
    %208 = vmax.xlane.f32.xlu0 %v207
    %v209 = vpop.xlane.xlu0 %208
    %v210 = vsub.f32 %v202, %v206
    %v211 = vsub.f32 %v203, %v209
    %v212 = vmul.f32 %v210, 1.442695
    %v213 = vpow.pop %v212
    %v214 = vmul.f32 %v211, 1.442695
    %v215 = vpow.pop %v214
    %v216 = vsel %vm156, %v213, 0.0
    %217 = vadd.xlane.f32.xlu0 %v216
    %v218 = vpop.xlane.xlu0 %217
    %v219 = vsel %vm156, %v215, 0.0
    %220 = vadd.xlane.f32.xlu0 %v219
    %v221 = vpop.xlane.xlu0 %220
    %v222 = vpack.c.bf16 %v213, %v213
    %v223 = vpack.c.bf16 %v215, %v215
    %224 = vrot.lane.b32.xlu0 %v153, 64
    %v225 = vpop.permute.xlu0 %224
    %v227 = vsel %vm156, %v222, 0
    %vm229 = vcmask 1043456
    %v231 = vsel %vm229, %v225, 0
    %233 = vmatpush.bf16.msra.mxu0 0
    %234 = vmatpush.bf16.msra.mxu0 0
    %235 = vmatpush.bf16.msra.mxu0 0
    %236 = vmatpush.bf16.msra.mxu0 0
    %237 = vmatpush.bf16.msra.mxu0 0
    %238 = vmatpush.bf16.msra.mxu0 0
    %239 = vmatpush.bf16.msra.mxu0 0
    %240 = vmatpush.bf16.msra.mxu0 %v231
    %241 = vmatmul.bf16.gmra.mxu0 %v227
    %v242 = vpop.f32.mrf.mxu0
    %v243 = vadd.f32 0.0, %v242
    %v244 = vpop.f32.mrf.mxu0
    %245 = vdwg.mxu0
    %246 = vrot.lane.b32.xlu0 %v178, 64
    %v247 = vpop.permute.xlu0 %246
    %v249 = vsel %vm156, %v223, 0
    %v252 = vsel %vm229, %v247, 0
    %254 = vmatpush.bf16.msra.mxu0 0
    %255 = vmatpush.bf16.msra.mxu0 0
    %256 = vmatpush.bf16.msra.mxu0 0
    %257 = vmatpush.bf16.msra.mxu0 0
    %258 = vmatpush.bf16.msra.mxu0 0
    %259 = vmatpush.bf16.msra.mxu0 0
    %260 = vmatpush.bf16.msra.mxu0 0
    %261 = vmatpush.bf16.msra.mxu0 %v252
    %262 = vmatmul.bf16.gmra.mxu0 %v249
    %v263 = vpop.f32.mrf.mxu0
    %v264 = vadd.f32 0.0, %v263
    %v265 = vpop.f32.mrf.mxu0
    %266 = vdwg.mxu0
    %v267 = vrcp.pop %v218
    %v268 = vrcp.pop %v221
    %v269 = vmul.f32 %v243, %v267
    %v270 = vmul.f32 %v264, %v268
    %v272 = vunpack.c.l.b16 %v147
    %v273 = vpack.c.b16 %v272, %v272
    %274 = vrot.lane.b32.xlu0 %v273, 120
    %v275 = vpop.permute.xlu0 %274
    %276 = vrot.lane.b32.xlu0 %v153, 88
    %v277 = vpop.permute.xlu0 %276
    %v279 = vsel %vm156, %v275, 0
    %v282 = vsel %vm156, %v277, 0
    %284 = vmatpush.bf16.xpose.msra.mxu0 0
    %285 = vmatpush.bf16.xpose.msra.mxu0 0
    %286 = vmatpush.bf16.xpose.msra.mxu0 0
    %287 = vmatpush.bf16.xpose.msra.mxu0 0
    %288 = vmatpush.bf16.xpose.msra.mxu0 0
    %289 = vmatpush.bf16.xpose.msra.mxu0 0
    %290 = vmatpush.bf16.xpose.msra.mxu0 0
    %291 = vmatpush.bf16.xpose.msra.mxu0 %v282
    %292 = vmatmul.bf16.gmra.mxu0 %v279
    %v293 = vpop.f32.mrf.mxu0
    %v294 = vadd.f32 0.0, %v293
    %v295 = vpop.f32.mrf.mxu0
    %296 = vdwg.mxu0
    %v298 = vunpack.c.l.b16 %v148
    %v299 = vpack.c.b16 %v298, %v298
    %300 = vrot.lane.b32.xlu0 %v299, 120
    %v301 = vpop.permute.xlu0 %300
    %302 = vrot.lane.b32.xlu0 %v178, 88
    %v303 = vpop.permute.xlu0 %302
    %v305 = vsel %vm156, %v301, 0
    %v308 = vsel %vm156, %v303, 0
    %310 = vmatpush.bf16.xpose.msra.mxu0 0
    %311 = vmatpush.bf16.xpose.msra.mxu0 0
    %312 = vmatpush.bf16.xpose.msra.mxu0 0
    %313 = vmatpush.bf16.xpose.msra.mxu0 0
    %314 = vmatpush.bf16.xpose.msra.mxu0 0
    %315 = vmatpush.bf16.xpose.msra.mxu0 0
    %316 = vmatpush.bf16.xpose.msra.mxu0 0
    %317 = vmatpush.bf16.xpose.msra.mxu0 %v308
    %318 = vmatmul.bf16.gmra.mxu0 %v305
    %v319 = vpop.f32.mrf.mxu0
    %v320 = vadd.f32 0.0, %v319
    %v321 = vpop.f32.mrf.mxu0
    %322 = vdwg.mxu0
    %v323 = vsel %vm201, %v294, -inf
    %v324 = vsel %vm201, %v320, -inf
    %v325 = vsel %vm156, %v323, -inf
    %326 = vmax.xlane.f32.xlu0 %v325
    %v327 = vpop.xlane.xlu0 %326
    %v328 = vsel %vm156, %v324, -inf
    %329 = vmax.xlane.f32.xlu0 %v328
    %v330 = vpop.xlane.xlu0 %329
    %v331 = vsub.f32 %v323, %v327
    %v332 = vsub.f32 %v324, %v330
    %v333 = vmul.f32 %v331, 1.442695
    %v334 = vpow.pop %v333
    %v335 = vmul.f32 %v332, 1.442695
    %v336 = vpow.pop %v335
    %v337 = vsel %vm156, %v334, 0.0
    %338 = vadd.xlane.f32.xlu0 %v337
    %v339 = vpop.xlane.xlu0 %338
    %v340 = vsel %vm156, %v336, 0.0
    %341 = vadd.xlane.f32.xlu0 %v340
    %v342 = vpop.xlane.xlu0 %341
    %v343 = vpack.c.bf16 %v334, %v334
    %v344 = vpack.c.bf16 %v336, %v336
    %345 = vrot.lane.b32.xlu0 %v153, 56
    %v346 = vpop.permute.xlu0 %345
    %v348 = vsel %vm156, %v343, 0
    %v351 = vsel %vm229, %v346, 0
    %353 = vmatpush.bf16.msra.mxu0 0
    %354 = vmatpush.bf16.msra.mxu0 0
    %355 = vmatpush.bf16.msra.mxu0 0
    %356 = vmatpush.bf16.msra.mxu0 0
    %357 = vmatpush.bf16.msra.mxu0 0
    %358 = vmatpush.bf16.msra.mxu0 0
    %359 = vmatpush.bf16.msra.mxu0 0
    %360 = vmatpush.bf16.msra.mxu0 %v351
    %361 = vmatmul.bf16.gmra.mxu0 %v348
    %v362 = vpop.f32.mrf.mxu0
    %v363 = vadd.f32 0.0, %v362
    %v364 = vpop.f32.mrf.mxu0
    %365 = vdwg.mxu0
    %366 = vrot.lane.b32.xlu0 %v178, 56
    %v367 = vpop.permute.xlu0 %366
    %v369 = vsel %vm156, %v344, 0
    %v372 = vsel %vm229, %v367, 0
    %374 = vmatpush.bf16.msra.mxu0 0
    %375 = vmatpush.bf16.msra.mxu0 0
    %376 = vmatpush.bf16.msra.mxu0 0
    %377 = vmatpush.bf16.msra.mxu0 0
    %378 = vmatpush.bf16.msra.mxu0 0
    %379 = vmatpush.bf16.msra.mxu0 0
    %380 = vmatpush.bf16.msra.mxu0 0
    %381 = vmatpush.bf16.msra.mxu0 %v372
    %382 = vmatmul.bf16.gmra.mxu0 %v369
    %v383 = vpop.f32.mrf.mxu0
    %v384 = vadd.f32 0.0, %v383
    %v385 = vpop.f32.mrf.mxu0
    %386 = vdwg.mxu0
    %v387 = vrcp.pop %v339
    %v388 = vrcp.pop %v342
    %v389 = vmul.f32 %v363, %v387
    %v390 = vmul.f32 %v384, %v388
    %391 = vrot.lane.b32.xlu0 %v273, 112
    %v392 = vpop.permute.xlu0 %391
    %393 = vrot.lane.b32.xlu0 %v153, 80
    %v394 = vpop.permute.xlu0 %393
    %v396 = vsel %vm156, %v392, 0
    %v399 = vsel %vm156, %v394, 0
    %401 = vmatpush.bf16.xpose.msra.mxu0 0
    %402 = vmatpush.bf16.xpose.msra.mxu0 0
    %403 = vmatpush.bf16.xpose.msra.mxu0 0
    %404 = vmatpush.bf16.xpose.msra.mxu0 0
    %405 = vmatpush.bf16.xpose.msra.mxu0 0
    %406 = vmatpush.bf16.xpose.msra.mxu0 0
    %407 = vmatpush.bf16.xpose.msra.mxu0 0
    %408 = vmatpush.bf16.xpose.msra.mxu0 %v399
    %409 = vmatmul.bf16.gmra.mxu0 %v396
    %v410 = vpop.f32.mrf.mxu0
    %v411 = vadd.f32 0.0, %v410
    %v412 = vpop.f32.mrf.mxu0
    %413 = vdwg.mxu0
    %414 = vrot.lane.b32.xlu0 %v299, 112
    %v415 = vpop.permute.xlu0 %414
    %416 = vrot.lane.b32.xlu0 %v178, 80
    %v417 = vpop.permute.xlu0 %416
    %v419 = vsel %vm156, %v415, 0
    %v422 = vsel %vm156, %v417, 0
    %424 = vmatpush.bf16.xpose.msra.mxu0 0
    %425 = vmatpush.bf16.xpose.msra.mxu0 0
    %426 = vmatpush.bf16.xpose.msra.mxu0 0
    %427 = vmatpush.bf16.xpose.msra.mxu0 0
    %428 = vmatpush.bf16.xpose.msra.mxu0 0
    %429 = vmatpush.bf16.xpose.msra.mxu0 0
    %430 = vmatpush.bf16.xpose.msra.mxu0 0
    %431 = vmatpush.bf16.xpose.msra.mxu0 %v422
    %432 = vmatmul.bf16.gmra.mxu0 %v419
    %v433 = vpop.f32.mrf.mxu0
    %v434 = vadd.f32 0.0, %v433
    %v435 = vpop.f32.mrf.mxu0
    %436 = vdwg.mxu0
    %v437 = vsel %vm201, %v411, -inf
    %v438 = vsel %vm201, %v434, -inf
    %v439 = vsel %vm156, %v437, -inf
    %440 = vmax.xlane.f32.xlu0 %v439
    %v441 = vpop.xlane.xlu0 %440
    %v442 = vsel %vm156, %v438, -inf
    %443 = vmax.xlane.f32.xlu0 %v442
    %v444 = vpop.xlane.xlu0 %443
    %v445 = vsub.f32 %v437, %v441
    %v446 = vsub.f32 %v438, %v444
    %v447 = vmul.f32 %v445, 1.442695
    %v448 = vpow.pop %v447
    %v449 = vmul.f32 %v446, 1.442695
    %v450 = vpow.pop %v449
    %v451 = vsel %vm156, %v448, 0.0
    %452 = vadd.xlane.f32.xlu0 %v451
    %v453 = vpop.xlane.xlu0 %452
    %v454 = vsel %vm156, %v450, 0.0
    %455 = vadd.xlane.f32.xlu0 %v454
    %v456 = vpop.xlane.xlu0 %455
    %v457 = vpack.c.bf16 %v448, %v448
    %v458 = vpack.c.bf16 %v450, %v450
    %459 = vrot.lane.b32.xlu0 %v153, 48
    %v460 = vpop.permute.xlu0 %459
    %v462 = vsel %vm156, %v457, 0
    %v465 = vsel %vm229, %v460, 0
    %467 = vmatpush.bf16.msra.mxu0 0
    %468 = vmatpush.bf16.msra.mxu0 0
    %469 = vmatpush.bf16.msra.mxu0 0
    %470 = vmatpush.bf16.msra.mxu0 0
    %471 = vmatpush.bf16.msra.mxu0 0
    %472 = vmatpush.bf16.msra.mxu0 0
    %473 = vmatpush.bf16.msra.mxu0 0
    %474 = vmatpush.bf16.msra.mxu0 %v465
    %475 = vmatmul.bf16.gmra.mxu0 %v462
    %v476 = vpop.f32.mrf.mxu0
    %v477 = vadd.f32 0.0, %v476
    %v478 = vpop.f32.mrf.mxu0
    %479 = vdwg.mxu0
    %480 = vrot.lane.b32.xlu0 %v178, 48
    %v481 = vpop.permute.xlu0 %480
    %v483 = vsel %vm156, %v458, 0
    %v486 = vsel %vm229, %v481, 0
    %488 = vmatpush.bf16.msra.mxu0 0
    %489 = vmatpush.bf16.msra.mxu0 0
    %490 = vmatpush.bf16.msra.mxu0 0
    %491 = vmatpush.bf16.msra.mxu0 0
    %492 = vmatpush.bf16.msra.mxu0 0
    %493 = vmatpush.bf16.msra.mxu0 0
    %494 = vmatpush.bf16.msra.mxu0 0
    %495 = vmatpush.bf16.msra.mxu0 %v486
    %496 = vmatmul.bf16.gmra.mxu0 %v483
    %v497 = vpop.f32.mrf.mxu0
    %v498 = vadd.f32 0.0, %v497
    %v499 = vpop.f32.mrf.mxu0
    %500 = vdwg.mxu0
    %v501 = vrcp.pop %v453
    %v502 = vrcp.pop %v456
    %v503 = vmul.f32 %v477, %v501
    %v504 = vmul.f32 %v498, %v502
    %505 = vrot.lane.b32.xlu0 %v273, 104
    %v506 = vpop.permute.xlu0 %505
    %507 = vrot.lane.b32.xlu0 %v153, 72
    %v508 = vpop.permute.xlu0 %507
    %v510 = vsel %vm156, %v506, 0
    %v513 = vsel %vm156, %v508, 0
    %515 = vmatpush.bf16.xpose.msra.mxu0 0
    %516 = vmatpush.bf16.xpose.msra.mxu0 0
    %517 = vmatpush.bf16.xpose.msra.mxu0 0
    %518 = vmatpush.bf16.xpose.msra.mxu0 0
    %519 = vmatpush.bf16.xpose.msra.mxu0 0
    %520 = vmatpush.bf16.xpose.msra.mxu0 0
    %521 = vmatpush.bf16.xpose.msra.mxu0 0
    %522 = vmatpush.bf16.xpose.msra.mxu0 %v513
    %523 = vmatmul.bf16.gmra.mxu0 %v510
    %v524 = vpop.f32.mrf.mxu0
    %v525 = vadd.f32 0.0, %v524
    %v526 = vpop.f32.mrf.mxu0
    %527 = vdwg.mxu0
    %528 = vrot.lane.b32.xlu0 %v299, 104
    %v529 = vpop.permute.xlu0 %528
    %530 = vrot.lane.b32.xlu0 %v178, 72
    %v531 = vpop.permute.xlu0 %530
    %v533 = vsel %vm156, %v529, 0
    %v536 = vsel %vm156, %v531, 0
    %538 = vmatpush.bf16.xpose.msra.mxu0 0
    %539 = vmatpush.bf16.xpose.msra.mxu0 0
    %540 = vmatpush.bf16.xpose.msra.mxu0 0
    %541 = vmatpush.bf16.xpose.msra.mxu0 0
    %542 = vmatpush.bf16.xpose.msra.mxu0 0
    %543 = vmatpush.bf16.xpose.msra.mxu0 0
    %544 = vmatpush.bf16.xpose.msra.mxu0 0
    %545 = vmatpush.bf16.xpose.msra.mxu0 %v536
    %546 = vmatmul.bf16.gmra.mxu0 %v533
    %v547 = vpop.f32.mrf.mxu0
    %v548 = vadd.f32 0.0, %v547
    %v549 = vpop.f32.mrf.mxu0
    %550 = vdwg.mxu0
    %v551 = vsel %vm201, %v525, -inf
    %v552 = vsel %vm201, %v548, -inf
    %v553 = vsel %vm156, %v551, -inf
    %554 = vmax.xlane.f32.xlu0 %v553
    %v555 = vpop.xlane.xlu0 %554
    %v556 = vsel %vm156, %v552, -inf
    %557 = vmax.xlane.f32.xlu0 %v556
    %v558 = vpop.xlane.xlu0 %557
    %v559 = vsub.f32 %v551, %v555
    %v560 = vsub.f32 %v552, %v558
    %v561 = vmul.f32 %v559, 1.442695
    %v562 = vpow.pop %v561
    %v563 = vmul.f32 %v560, 1.442695
    %v564 = vpow.pop %v563
    %v565 = vsel %vm156, %v562, 0.0
    %566 = vadd.xlane.f32.xlu0 %v565
    %v567 = vpop.xlane.xlu0 %566
    %v568 = vsel %vm156, %v564, 0.0
    %569 = vadd.xlane.f32.xlu0 %v568
    %v570 = vpop.xlane.xlu0 %569
    %v571 = vpack.c.bf16 %v562, %v562
    %v572 = vpack.c.bf16 %v564, %v564
    %573 = vrot.lane.b32.xlu0 %v153, 40
    %v574 = vpop.permute.xlu0 %573
    %v576 = vsel %vm156, %v571, 0
    %v579 = vsel %vm229, %v574, 0
    %581 = vmatpush.bf16.msra.mxu0 0
    %582 = vmatpush.bf16.msra.mxu0 0
    %583 = vmatpush.bf16.msra.mxu0 0
    %584 = vmatpush.bf16.msra.mxu0 0
    %585 = vmatpush.bf16.msra.mxu0 0
    %586 = vmatpush.bf16.msra.mxu0 0
    %587 = vmatpush.bf16.msra.mxu0 0
    %588 = vmatpush.bf16.msra.mxu0 %v579
    %589 = vmatmul.bf16.gmra.mxu0 %v576
    %v590 = vpop.f32.mrf.mxu0
    %v591 = vadd.f32 0.0, %v590
    %v592 = vpop.f32.mrf.mxu0
    %593 = vdwg.mxu0
    %594 = vrot.lane.b32.xlu0 %v178, 40
    %v595 = vpop.permute.xlu0 %594
    %v597 = vsel %vm156, %v572, 0
    %v600 = vsel %vm229, %v595, 0
    %602 = vmatpush.bf16.msra.mxu0 0
    %603 = vmatpush.bf16.msra.mxu0 0
    %604 = vmatpush.bf16.msra.mxu0 0
    %605 = vmatpush.bf16.msra.mxu0 0
    %606 = vmatpush.bf16.msra.mxu0 0
    %607 = vmatpush.bf16.msra.mxu0 0
    %608 = vmatpush.bf16.msra.mxu0 0
    %609 = vmatpush.bf16.msra.mxu0 %v600
    %610 = vmatmul.bf16.gmra.mxu0 %v597
    %v611 = vpop.f32.mrf.mxu0
    %v612 = vadd.f32 0.0, %v611
    %v613 = vpop.f32.mrf.mxu0
    %614 = vdwg.mxu0
    %v615 = vrcp.pop %v567
    %v616 = vrcp.pop %v570
    %v617 = vmul.f32 %v591, %v615
    %v618 = vmul.f32 %v612, %v616
    %621 = vrot.lane.b32.xlu0 %v389, 8
    %v622 = vpop.permute.xlu0 %621
    %623 = vrot.lane.b32.xlu0 %v390, 8
    %v624 = vpop.permute.xlu0 %623
    %629 = vrot.lane.b32.xlu0 %v503, 16
    %v630 = vpop.permute.xlu0 %629
    %631 = vrot.lane.b32.xlu0 %v504, 16
    %v632 = vpop.permute.xlu0 %631
    %637 = vrot.lane.b32.xlu0 %v617, 24
    %v638 = vpop.permute.xlu0 %637
    %639 = vrot.lane.b32.xlu0 %v618, 24
    %v640 = vpop.permute.xlu0 %639
    %v643 = vsel %vm156, %v269, %v622
    %v644 = vsel %vm156, %v270, %v624
    %vm645 = vcmask 130048
    %v646 = vsel %vm645, %v643, %v630
    %v647 = vsel %vm645, %v644, %v632
    %vm648 = vcmask 195584
    %v649 = vsel %vm648, %v646, %v638
    %v650 = vsel %vm648, %v647, %v640
    %v651 = vpack.c.bf16 %v650, %v649
    %v652 = vld [vmem:[%s4] sm:$0xf]
    %v653 = vld [vmem:[%s4 + $0x4] sm:$0xf]
    %v654 = vld [vmem:[%s4 + $0x8] sm:$0xf]
    %v655 = vld [vmem:[%s4 + $0xc] sm:$0xf]
    %v660 = vunpack.c.l.b16 %v652
    %v661 = vunpack.c.l.b16 %v653
    %v662 = vunpack.c.l.b16 %v654
    %v663 = vunpack.c.l.b16 %v655
    %v664 = vpack.c.b16 %v661, %v660
    %v665 = vpack.c.b16 %v663, %v662
    %v669 = vsel %vm44, %v651, 0
    %671 = vmatpush.bf16.msra.mxu0 0
    %672 = vmatpush.bf16.msra.mxu0 0
    %673 = vmatpush.bf16.msra.mxu0 0
    %674 = vmatpush.bf16.msra.mxu0 0
    %675 = vmatpush.bf16.msra.mxu0 0
    %676 = vmatpush.bf16.msra.mxu0 0
    %677 = vmatpush.bf16.msra.mxu0 %v665
    %678 = vmatpush.bf16.msra.mxu0 %v664
    %679 = vmatmul.bf16.gmra.mxu0 %v669
    %v680 = vpop.f32.mrf.mxu0
    %v681 = vadd.f32 0.0, %v680
    %v682 = vpop.f32.mrf.mxu0
    %v683 = vadd.f32 0.0, %v682
    %684 = vdwg.mxu0
    %v685 = vadd.f32 %v40, %v681
    %v686 = vadd.f32 %v41, %v683
    %v687 = vld [vmem:[%s5] sm:$0x1]
    %v688 = vld [vmem:[%s6] sm:$0x1]
    %v689 = vsel %vm44, %v685, 0.0
    %690 = vadd.xlane.f32.xlu0 %v689
    %v691 = vpop.xlane.xlu0 %690
    %v692 = vsel %vm44, %v686, 0.0
    %693 = vadd.xlane.f32.xlu0 %v692
    %v694 = vpop.xlane.xlu0 %693
    %v695 = vmul.f32 %v691, %v57
    %v696 = vmul.f32 %v694, %v57
    %v697 = vsub.f32 %v685, %v695
    %v698 = vsub.f32 %v686, %v696
    %v699 = vmul.f32 %v697, %v697
    %v700 = vmul.f32 %v698, %v698
    %v701 = vsel %vm44, %v699, 0.0
    %702 = vadd.xlane.f32.xlu0 %v701
    %v703 = vpop.xlane.xlu0 %702
    %v704 = vsel %vm44, %v700, 0.0
    %705 = vadd.xlane.f32.xlu0 %v704
    %v706 = vpop.xlane.xlu0 %705
    %v707 = vmul.f32 %v703, %v57
    %v708 = vmul.f32 %v706, %v57
    %v709 = vadd.f32 %v707, 1e-05
    %v710 = vadd.f32 %v708, 1e-05
    %v711 = vrsqrt.pop %v709
    %v712 = vmul.f32 %v711, %v709
    %v713 = vmul.f32 %v712, %v711
    %v714 = vmul.f32 0.5, %v713
    %v715 = vsub.f32 1.5, %v714
    %v716 = vmul.f32 %v711, %v715
    %vm717 = vweird.f32 %v709
    %vm718 = vweird.f32 %v711
    %vm719 = vmor %vm717, %vm718
    %v720 = vsel %vm719, %v711, %v716
    %v721 = vrsqrt.pop %v710
    %v722 = vmul.f32 %v721, %v710
    %v723 = vmul.f32 %v722, %v721
    %v724 = vmul.f32 0.5, %v723
    %v725 = vsub.f32 1.5, %v724
    %v726 = vmul.f32 %v721, %v725
    %vm727 = vweird.f32 %v710
    %vm728 = vweird.f32 %v721
    %vm729 = vmor %vm727, %vm728
    %v730 = vsel %vm729, %v721, %v726
    %v731 = vmul.f32 %v697, %v720
    %v732 = vmul.f32 %v698, %v730
    %v734 = vperm.slane %v687, 0
    %v736 = vmul.f32 %v731, %v734
    %v737 = vmul.f32 %v732, %v734
    %v739 = vperm.slane %v688, 0
    %v741 = vadd.f32 %v736, %v739
    %v742 = vadd.f32 %v737, %v739
    %v743 = vpack.c.bf16 %v742, %v741
    %v744 = vld [vmem:[%s7] sm:$0xf]
    %v745 = vld [vmem:[%s7 + $0x4] sm:$0xf]
    %v746 = vld [vmem:[%s7 + $0x8] sm:$0xf]
    %v747 = vld [vmem:[%s7 + $0xc] sm:$0xf]
    %v748 = vld [vmem:[%s8] sm:$0x1]
    %v750 = vperm.slane %v748, 0
    %v756 = vunpack.c.l.b16 %v744
    %v757 = vunpack.c.l.b16 %v745
    %v758 = vunpack.c.l.b16 %v746
    %v759 = vunpack.c.l.b16 %v747
    %v760 = vpack.c.b16 %v757, %v756
    %v761 = vpack.c.b16 %v759, %v758
    %v765 = vsel %vm44, %v743, 0
    %767 = vmatpush.bf16.msra.mxu0 0
    %768 = vmatpush.bf16.msra.mxu0 0
    %769 = vmatpush.bf16.msra.mxu0 0
    %770 = vmatpush.bf16.msra.mxu0 0
    %771 = vmatpush.bf16.msra.mxu0 0
    %772 = vmatpush.bf16.msra.mxu0 0
    %773 = vmatpush.bf16.msra.mxu0 %v761
    %774 = vmatpush.bf16.msra.mxu0 %v760
    %775 = vmatmul.bf16.gmra.mxu0 %v765
    %v776 = vpop.f32.mrf.mxu0
    %v777 = vadd.f32 %v750, %v776
    %v778 = vpop.f32.mrf.mxu0
    %v779 = vadd.f32 %v750, %v778
    %780 = vdwg.mxu0
    %v781 = vmul.f32 %v777, 0.5
    %v782 = vmul.f32 %v779, 0.5
    %v783 = vmul.f32 %v777, 0.70710677
    %v784 = vmul.f32 %v779, 0.70710677
    %v785 = vand.u32 2147483647, %v783
    %v786 = vand.u32 2147483647, %v784
    %v787 = vmul.f32 %v785, 0.3275911
    %v788 = vmul.f32 %v786, 0.3275911
    %v789 = vadd.f32 %v787, 1.0
    %v790 = vadd.f32 %v788, 1.0
    %v791 = vrcp.pop %v789
    %v792 = vrcp.pop %v790
    %v793 = vmul.f32 %v791, 1.0614054
    %v794 = vmul.f32 %v792, 1.0614054
    %v795 = vadd.f32 %v793, -1.4531521
    %v796 = vadd.f32 %v794, -1.4531521
    %v797 = vmul.f32 %v795, %v791
    %v798 = vmul.f32 %v796, %v792
    %v799 = vadd.f32 %v797, 1.4214138
    %v800 = vadd.f32 %v798, 1.4214138
    %v801 = vmul.f32 %v799, %v791
    %v802 = vmul.f32 %v800, %v792
    %v803 = vadd.f32 %v801, -0.28449672
    %v804 = vadd.f32 %v802, -0.28449672
    %v805 = vmul.f32 %v803, %v791
    %v806 = vmul.f32 %v804, %v792
    %v807 = vadd.f32 %v805, 0.2548296
    %v808 = vadd.f32 %v806, 0.2548296
    %v809 = vmul.f32 %v807, %v791
    %v810 = vmul.f32 %v808, %v792
    %v811 = vsub.f32 0.0, %v785
    %v812 = vsub.f32 0.0, %v786
    %v813 = vmul.f32 %v811, %v785
    %v814 = vmul.f32 %v812, %v786
    %v815 = vmul.f32 %v813, 1.442695
    %v816 = vpow.pop %v815
    %v817 = vmul.f32 %v814, 1.442695
    %v818 = vpow.pop %v817
    %v819 = vmul.f32 %v809, %v816
    %v820 = vmul.f32 %v810, %v818
    %v821 = vsub.f32 1.0, %v819
    %v822 = vsub.f32 1.0, %v820
    %vm823 = vcmp.ge.f32.partialorder %v783, 0.0
    %vm824 = vcmp.ge.f32.partialorder %v784, 0.0
    %v825 = vsub.f32 0.0, %v821
    %v826 = vsub.f32 0.0, %v822
    %v827 = vsel %vm823, %v821, %v825
    %v828 = vsel %vm824, %v822, %v826
    %v829 = vadd.f32 %v827, 1.0
    %v830 = vadd.f32 %v828, 1.0
    %v831 = vmul.f32 %v781, %v829
    %v832 = vmul.f32 %v782, %v830
    %v833 = vpack.c.bf16 %v832, %v831
    %v834 = vld [vmem:[%s9] sm:$0xf]
    %v835 = vld [vmem:[%s9 + $0x4] sm:$0xf]
    %v836 = vld [vmem:[%s9 + $0x8] sm:$0xf]
    %v837 = vld [vmem:[%s9 + $0xc] sm:$0xf]
    %v838 = vld [vmem:[%s9 + $0x10] sm:$0xf]
    %v839 = vld [vmem:[%s9 + $0x14] sm:$0xf]
    %v840 = vld [vmem:[%s9 + $0x18] sm:$0xf]
    %v841 = vld [vmem:[%s9 + $0x1c] sm:$0xf]
    %v842 = vld [vmem:[%s9 + $0x20] sm:$0xf]
    %v843 = vld [vmem:[%s9 + $0x24] sm:$0xf]
    %v844 = vld [vmem:[%s9 + $0x28] sm:$0xf]
    %v845 = vld [vmem:[%s9 + $0x2c] sm:$0xf]
    %v846 = vld [vmem:[%s9 + $0x30] sm:$0xf]
    %v847 = vld [vmem:[%s9 + $0x34] sm:$0xf]
    %v848 = vld [vmem:[%s9 + $0x38] sm:$0xf]
    %v849 = vld [vmem:[%s9 + $0x3c] sm:$0xf]
    %v850 = vld [vmem:[%s10] sm:$0x1]
    %v852 = vperm.slane %v850, 0
    %v870 = vunpack.c.l.b16 %v834
    %v871 = vunpack.c.l.b16 %v835
    %v872 = vunpack.c.l.b16 %v836
    %v873 = vunpack.c.l.b16 %v837
    %v874 = vunpack.c.l.b16 %v838
    %v875 = vunpack.c.l.b16 %v839
    %v876 = vunpack.c.l.b16 %v840
    %v877 = vunpack.c.l.b16 %v841
    %v878 = vunpack.c.l.b16 %v842
    %v879 = vunpack.c.l.b16 %v843
    %v880 = vunpack.c.l.b16 %v844
    %v881 = vunpack.c.l.b16 %v845
    %v882 = vunpack.c.l.b16 %v846
    %v883 = vunpack.c.l.b16 %v847
    %v884 = vunpack.c.l.b16 %v848
    %v885 = vunpack.c.l.b16 %v849
    %v886 = vpack.c.b16 %v871, %v870
    %v887 = vpack.c.b16 %v873, %v872
    %v888 = vpack.c.b16 %v875, %v874
    %v889 = vpack.c.b16 %v877, %v876
    %v890 = vpack.c.b16 %v879, %v878
    %v891 = vpack.c.b16 %v881, %v880
    %v892 = vpack.c.b16 %v883, %v882
    %v893 = vpack.c.b16 %v885, %v884
    %902 = vmatpush.bf16.msra.mxu0 %v893
    %903 = vmatpush.bf16.msra.mxu0 %v892
    %904 = vmatpush.bf16.msra.mxu0 %v891
    %905 = vmatpush.bf16.msra.mxu0 %v890
    %906 = vmatpush.bf16.msra.mxu0 %v889
    %907 = vmatpush.bf16.msra.mxu0 %v888
    %908 = vmatpush.bf16.msra.mxu0 %v887
    %909 = vmatpush.bf16.msra.mxu0 %v886
    %910 = vmatmul.bf16.gmra.mxu0 %v833
    %v911 = vpop.f32.mrf.mxu0
    %v912 = vadd.f32 %v852, %v911
    %v913 = vpop.f32.mrf.mxu0
    %v914 = vadd.f32 %v852, %v913
    %915 = vdwg.mxu0
    %v916 = vadd.f32 %v685, %v912
    %v917 = vadd.f32 %v686, %v914
    %918 = vst.msk [vmem:[#allocation2] sm:$0xff] %vm44, %v916
    %919 = vst.msk [vmem:[#allocation2 + $0x8] sm:$0xff] %vm44, %v917
    // Predicated region
    $region46: #{tpu_custom_call.1} parent=1 // pred_check
      _
    $region47: #{tpu_custom_call.1} parent=1 // pred_check_branch
      %921 = sbr.rel (0) target = $region49
    $region48: #{tpu_custom_call.1} parent=1 // pred_region
      %923 = vsyncadd [#allocation3], 0
      %s924 = sshll.u32 [#allocation2], 4
      %s925 = int_to_ptr.vmem [resolvable:$true] %s924
      %s926 = sshll.u32 %s11, 4
      %s927 = int_to_ptr.hbm [resolvable:$true] %s926
      %932 = dma.vmem_to_hbm [thread:$0]  %s925, 256, %s927, [#allocation3], 128, 128, 8
    $region49: #{tpu_custom_call.1} parent=1 // pred_fallthru
      _
    // Predicated region
    $region50: #{tpu_custom_call.1} parent=1 // pred_check
      _
    $region51: #{tpu_custom_call.1} parent=1 // pred_check_branch
      %934 = sbr.rel (0) target = $region53
    $region52: #{tpu_custom_call.1} parent=1 // pred_region
      %936 = dma.done [#allocation3], 256
    $region53: #{tpu_custom_call.1} parent=1 // pred_fallthru
      _
    %937 = vsyncpa [#allocation3], 1

</llo_original>
